<compile_context>
chip_gen: v7x
topology: tpu7x:2x2x1
jax: 0.10.0
libtpu: 0.0.40
codegen_flags: <defaults>
</compile_context>

<pallas_src>
import functools

import jax
import jax.numpy as jnp
from jax import lax
from jax.experimental import pallas as pl
from jax.experimental.pallas import tpu as pltpu


_SLAB_BUDGET_BYTES = 4 * 1024 * 1024   # per-strip bf16 im2col slab cap (v7x-safe)
_VMEM_LIMIT_BYTES = 48 * 1024 * 1024   # explicit scoped-VMEM limit (< v7x 64 MiB)


def _cparams():
    return pltpu.CompilerParams(dimension_semantics=("parallel",),
                                vmem_limit_bytes=_VMEM_LIMIT_BYTES)


def _full_spec(shape):
    """Whole-array block; index_map constant across the grid (weights).

    NOTE: these could be single-buffered (pipeline_mode=pl.Buffered(1)) to save
    the duplicate VMEM buffer when VMEM-tight; left at the default here.
    """
    nd = len(shape)
    return pl.BlockSpec(shape, lambda n, _nd=nd: (0,) * _nd)


def _pick_row_tile(H, W, kkc):
    """Largest divisor of H whose per-strip bf16 slab fits the VMEM budget."""
    per_row = W * kkc * 2  # bf16 bytes per output row of the slab
    tR = 1
    for t in range(1, H + 1):
        if H % t == 0 and t * per_row <= _SLAB_BUDGET_BYTES:
            tR = t
    return tR


# ---------------------------------------------------------------------------
# In-kernel helpers
# ---------------------------------------------------------------------------
def _zero_border(pad_ref, p, H, W):
    """Zero only the p-wide spatial border of pad_ref:(H+2p, W+2p, C)."""
    if p == 0:
        return
    Hp2, Wp2, C = pad_ref.shape
    z = pad_ref.dtype
    pad_ref[0:p, :, :] = jnp.zeros((p, Wp2, C), z)
    pad_ref[p + H:, :, :] = jnp.zeros((Hp2 - (p + H), Wp2, C), z)
    pad_ref[:, 0:p, :] = jnp.zeros((Hp2, p, C), z)
    pad_ref[:, p + W:, :] = jnp.zeros((Hp2, Wp2 - (p + W), C), z)


def _conv_strips(pad_ref, w_ref, K, H, W, store_fn):
    """KxK 'same' conv over a pre-filled bf16 padded buffer, row-strip tiled.

    pad_ref: (H+2p, W+2p, Cin) bf16, interior filled, border zero.
    w_ref:   (K*K*Cin, Cout) bf16 im2col weight matrix.
    Calls store_fn(r0, tR, y) with y:(tR*W, Cout) f32 for each output-row strip
    starting at row r0.  Strip tiling bounds the im2col slab's VMEM footprint.
    """
    Cin = pad_ref.shape[-1]
    kkc = K * K * Cin
    tR = _pick_row_tile(H, W, kkc)
    n_strips = H // tR

    def strip(r0):
        taps = [pad_ref[pl.ds(r0 + dh, tR), dw:dw + W, :]
                for dh in range(K) for dw in range(K)]
        slab = jnp.concatenate(taps, axis=-1).reshape(tR * W, kkc)   # bf16
        y = jnp.dot(slab, w_ref[...], preferred_element_type=jnp.float32)
        store_fn(r0, tR, y)

    if n_strips == 1:
        strip(0)
    else:
        def body(s, carry):
            strip(pl.multiple_of(s * tR, tR))
            return carry
        lax.fori_loop(0, n_strips, body, 0)


def _fill_cat(xp_ref, xs_ref, wup_ref, cat_ref, *, K):
    """ConvTranspose2d(k=2,s=2) -> F.pad -> concat(skip, up) into bf16 cat_ref."""
    _, Hp, Wp, Cin = xp_ref.shape
    _, Hs, Ws, Cs = xs_ref.shape
    Cup = wup_ref.shape[1] // 4
    Ccat = Cs + Cup
    p = K // 2
    dy = Hs - 2 * Hp                      # F.pad amounts (static)
    dx = Ws - 2 * Wp
    off_y, off_x = dy // 2, dx // 2

    # --- transposed conv: ONE matmul against (Cin, 4*Cup), then pure reshapes.
    xp = xp_ref[0].reshape(Hp * Wp, Cin).astype(jnp.bfloat16)
    up = jnp.dot(xp, wup_ref[...], preferred_element_type=jnp.float32)
    up = up.astype(jnp.bfloat16)          # cast once, before the interleave
    a = up[:, :2 * Cup].reshape(Hp, 2 * Wp, Cup)      # output rows 2i
    b = up[:, 2 * Cup:].reshape(Hp, 2 * Wp, Cup)      # output rows 2i+1
    up_img = jnp.concatenate([a[:, None], b[:, None]], axis=1).reshape(
        2 * Hp, 2 * Wp, Cup)

    # --- conv-padding border (all channels), every step (cores own scratch).
    _zero_border(cat_ref, p, Hs, Ws)
    # --- zero only the thin F.pad frame of the up channels (interior is
    #     fully overwritten by up_img below).
    if off_y:
        cat_ref[p:p + off_y, p:p + Ws, Cs:Ccat] = jnp.zeros(
            (off_y, Ws, Cup), cat_ref.dtype)
    if dy - off_y:
        cat_ref[p + off_y + 2 * Hp:p + Hs, p:p + Ws, Cs:Ccat] = jnp.zeros(
            (dy - off_y, Ws, Cup), cat_ref.dtype)
    if off_x:
        cat_ref[p + off_y:p + off_y + 2 * Hp, p:p + off_x, Cs:Ccat] = jnp.zeros(
            (2 * Hp, off_x, Cup), cat_ref.dtype)
    if dx - off_x:
        cat_ref[p + off_y:p + off_y + 2 * Hp, p + off_x + 2 * Wp:p + Ws,
                Cs:Ccat] = jnp.zeros((2 * Hp, dx - off_x, Cup), cat_ref.dtype)

    # --- channels [0:Cs] = skip, [Cs:Ccat] = upsampled ---
    cat_ref[p:p + Hs, p:p + Ws, 0:Cs] = xs_ref[0].astype(cat_ref.dtype)
    cat_ref[p + off_y:p + off_y + 2 * Hp,
            p + off_x:p + off_x + 2 * Wp, Cs:Ccat] = up_img


# ---------------------------------------------------------------------------
# Kernels
# ---------------------------------------------------------------------------
def bneck_kernel(x_ref, w_ref, o_ref, pad_ref, *, K):
    """bottleneck_conv: KxK same conv, no bias, one batch element."""
    _, H, W, _ = x_ref.shape
    Cout = o_ref.shape[-1]
    p = K // 2
    _zero_border(pad_ref, p, H, W)
    pad_ref[p:p + H, p:p + W, :] = x_ref[0].astype(pad_ref.dtype)

    def store(r0, tR, y):
        o_ref[0, pl.ds(r0, tR), :, :] = y.reshape(tR, W, Cout).astype(o_ref.dtype)

    _conv_strips(pad_ref, w_ref, K, H, W, store)


def up_block_kernel(xp_ref, xs_ref, wup_ref, wc_ref, o_ref, cat_ref, *, K):
    """One fused up_block for one batch element (bf16 output)."""
    _, Hs, Ws, _ = xs_ref.shape
    Cout = o_ref.shape[-1]
    _fill_cat(xp_ref, xs_ref, wup_ref, cat_ref, K=K)

    def store(r0, tR, y):
        o_ref[0, pl.ds(r0, tR), :, :] = y.reshape(tR, Ws, Cout).astype(o_ref.dtype)

    _conv_strips(cat_ref, wc_ref, K, Hs, Ws, store)


def up_block_out_kernel(xp_ref, xs_ref, wup_ref, wc_ref, wout_ref, o_ref,
                        cat_ref, *, K):
    """Last up_block fused with the trailing 1x1 out_conv.

    Output is lane-dense: o_ref has shape (1, ncls, Hs*Ws) (spatial on lanes).
    """
    _, Hs, Ws, _ = xs_ref.shape
    _fill_cat(xp_ref, xs_ref, wup_ref, cat_ref, K=K)

    def store(r0, tR, y):
        # z^T = w_out^T @ y^T via dot_general (no explicit transpose needed).
        zt = lax.dot_general(wout_ref[...], y.astype(jnp.bfloat16),
                             dimension_numbers=(((1,), (1,)), ((), ())),
                             preferred_element_type=jnp.float32)
        o_ref[0, :, pl.ds(r0 * Ws, tR * Ws)] = zt.astype(o_ref.dtype)

    _conv_strips(cat_ref, wc_ref, K, Hs, Ws, store)


def out_conv_kernel(x_ref, w_ref, o_ref):
    """Standalone 1x1 conv (only used when there are no up_blocks); lane-dense."""
    zt = lax.dot_general(w_ref[...], x_ref[0].astype(jnp.bfloat16),
                         dimension_numbers=(((1,), (1,)), ((), ())),
                         preferred_element_type=jnp.float32)
    o_ref[0] = zt.astype(o_ref.dtype)


# ---------------------------------------------------------------------------
# Wrappers (pallas_call plumbing)
# ---------------------------------------------------------------------------
def bottleneck_conv(x, w, K):
    N, H, W, C = x.shape
    p = K // 2
    w_mat = w.reshape(K * K * C, C).astype(jnp.bfloat16)
    return pl.pallas_call(
        functools.partial(bneck_kernel, K=K),
        out_shape=jax.ShapeDtypeStruct((N, H, W, C), jnp.bfloat16),
        grid_spec=pltpu.PrefetchScalarGridSpec(
            num_scalar_prefetch=0,
            grid=(N,),
            in_specs=[
                pl.BlockSpec((1, H, W, C), lambda n: (n, 0, 0, 0)),
                _full_spec((K * K * C, C)),
            ],
            out_specs=pl.BlockSpec((1, H, W, C), lambda n: (n, 0, 0, 0)),
            scratch_shapes=[pltpu.VMEM((H + 2 * p, W + 2 * p, C), jnp.bfloat16)],
        ),
        compiler_params=_cparams(),
    )(x, w_mat)


def up_block_apply(x_prev, x_skip, w_up, w_conv, K, w_out=None):
    N, Hp, Wp, Cin = x_prev.shape
    N2, Hs, Ws, Cs = x_skip.shape
    assert N == N2
    Cup = w_up.shape[-1]
    Ccat = Cs + Cup
    Cout = w_conv.shape[-1]
    assert w_conv.shape[2] == Ccat
    # TODO(synk): negative F.pad (cropping, x1 larger than x2) not supported.
    assert Hs >= 2 * Hp and Ws >= 2 * Wp
    p = K // 2

    # ConvTranspose weight (2,2,Cin,Cup) -> (Cin, 4*Cup), (di,dj)-tap-major cols.
    wup_mat = jnp.transpose(w_up, (2, 0, 1, 3)).reshape(Cin, 4 * Cup).astype(jnp.bfloat16)
    # Conv weight (K,K,Ccat,Cout) -> im2col matrix (K*K*Ccat, Cout).
    wc_mat = w_conv.reshape(K * K * Ccat, Cout).astype(jnp.bfloat16)

    in_specs = [
        pl.BlockSpec((1, Hp, Wp, Cin), lambda n: (n, 0, 0, 0)),
        pl.BlockSpec((1, Hs, Ws, Cs), lambda n: (n, 0, 0, 0)),
        _full_spec((Cin, 4 * Cup)),
        _full_spec((K * K * Ccat, Cout)),
    ]
    args = [x_prev, x_skip, wup_mat, wc_mat]

    if w_out is None:
        kern = functools.partial(up_block_kernel, K=K)
        out_shape = jax.ShapeDtypeStruct((N, Hs, Ws, Cout), jnp.bfloat16)
        out_spec = pl.BlockSpec((1, Hs, Ws, Cout), lambda n: (n, 0, 0, 0))
    else:
        ncls = w_out.shape[-1]
        in_specs.append(_full_spec((ncls, Cout)))
        args.append(jnp.transpose(w_out).astype(jnp.bfloat16))   # (ncls, Cout)
        kern = functools.partial(up_block_out_kernel, K=K)
        # Lane-dense final output: (N, ncls, Hs*Ws), spatial on the lane axis.
        out_shape = jax.ShapeDtypeStruct((N, ncls, Hs * Ws), jnp.float32)
        out_spec = pl.BlockSpec((1, ncls, Hs * Ws), lambda n: (n, 0, 0))

    y = pl.pallas_call(
        kern,
        out_shape=out_shape,
        grid_spec=pltpu.PrefetchScalarGridSpec(
            num_scalar_prefetch=0,
            grid=(N,),
            in_specs=in_specs,
            out_specs=out_spec,
            scratch_shapes=[pltpu.VMEM((Hs + 2 * p, Ws + 2 * p, Ccat),
                                       jnp.bfloat16)],
        ),
        compiler_params=_cparams(),
    )(*args)

    if w_out is None:
        return y
    return y.reshape(N, w_out.shape[-1], Hs, Ws).transpose(0, 2, 3, 1)


def out_conv_apply(x, w_out):
    """Standalone 1x1 conv (no up_blocks path); lane-dense, batch-tiled grid."""
    N, H, W, C = x.shape
    ncls = w_out.shape[-1]
    x2 = x.reshape(N, H * W, C)
    y = pl.pallas_call(
        out_conv_kernel,
        out_shape=jax.ShapeDtypeStruct((N, ncls, H * W), jnp.float32),
        grid_spec=pltpu.PrefetchScalarGridSpec(
            num_scalar_prefetch=0,
            grid=(N,),
            in_specs=[pl.BlockSpec((1, H * W, C), lambda n: (n, 0, 0)),
                      _full_spec((ncls, C))],
            out_specs=pl.BlockSpec((1, ncls, H * W), lambda n: (n, 0, 0)),
        ),
        compiler_params=_cparams(),
    )(x2, jnp.transpose(w_out).astype(jnp.bfloat16))
    return y.reshape(N, ncls, H, W).transpose(0, 2, 3, 1)


def dictionary_model_forward(x_list, params, K):
    """dictionary_model.forward(x_list) (NHWC)."""
    x_prev = bottleneck_conv(x_list[0], params["w_bneck"], K)
    blocks = params["blocks"]
    n_blk = len(blocks)
    for i, bp in enumerate(blocks):
        w_out = params["w_out"] if i == n_blk - 1 else None
        x_prev = up_block_apply(x_prev, x_list[i + 1], bp["w_up"], bp["w_conv"],
                                K, w_out=w_out)
    if n_blk == 0:
        x_prev = out_conv_apply(x_prev, params["w_out"])
    return x_prev


# ---------------------------------------------------------------------------
# Pure-JAX reference (same bf16-operand / f32-accumulate math as the kernels)
# ---------------------------------------------------------------------------
def _conv_same_ref(x, w):
    return lax.conv_general_dilated(
        x.astype(jnp.bfloat16), w.astype(jnp.bfloat16), (1, 1), "SAME",
        dimension_numbers=("NHWC", "HWIO", "NHWC"),
        preferred_element_type=jnp.float32)


def _conv_transpose2x2_ref(x, w):
    # PyTorch ConvTranspose2d(k=2, s=2, bias=False):
    #   out[n, 2i+di, 2j+dj, o] = sum_c x[n,i,j,c] * w[di,dj,c,o]
    N, H, W, _ = x.shape
    Cout = w.shape[-1]
    t = jnp.einsum("nhwc,ijco->nhwijo", x.astype(jnp.bfloat16),
                   w.astype(jnp.bfloat16), preferred_element_type=jnp.float32)
    return t.transpose(0, 1, 3, 2, 4, 5).reshape(N, 2 * H, 2 * W, Cout)


def _up_block_ref(x1, x2, w_up, w_conv):
    up = _conv_transpose2x2_ref(x1, w_up)
    dy = x2.shape[1] - up.shape[1]
    dx = x2.shape[2] - up.shape[2]
    up = jnp.pad(up, ((0, 0), (dy // 2, dy - dy // 2),
                      (dx // 2, dx - dx // 2), (0, 0)))
    cat = jnp.concatenate([x2, up], axis=-1)
    return _conv_same_ref(cat, w_conv)


def dictionary_model_ref(x_list, params, K):
    x_prev = _conv_same_ref(x_list[0], params["w_bneck"])
    for i, bp in enumerate(params["blocks"]):
        x_prev = _up_block_ref(x_prev, x_list[i + 1], bp["w_up"], bp["w_conv"])
    return jnp.einsum("nhwc,co->nhwo", x_prev.astype(jnp.bfloat16),
                      params["w_out"].astype(jnp.bfloat16),
                      preferred_element_type=jnp.float32)


# ---------------------------------------------------------------------------
# Main
# ---------------------------------------------------------------------------
if __name__ == "__main__":
    K = 3                                   # kernel_size
    hidden_layer_width_list = [64, 48, 40]  # 2 up_blocks
    n_classes = 4
    N, H0, W0 = 2, 8, 8

    widths = hidden_layer_width_list
    key = jax.random.PRNGKey(0)

    # x_list[0]: (N,H0,W0,widths[0]); x_list[i]: widths[i-1]-32 channels, 2x spatial.
    x_list = []
    key, k0 = jax.random.split(key)
    x_list.append(jax.random.normal(k0, (N, H0, W0, widths[0]), jnp.float32))
    h, w_sp = H0, W0
    for i in range(1, len(widths)):
        h, w_sp = 2 * h, 2 * w_sp
        key, ki = jax.random.split(key)
        x_list.append(jax.random.normal(ki, (N, h, w_sp, widths[i - 1] - 32),
                                        jnp.float32))

    def init_conv(k, kh, kw, cin, cout):
        return (jax.random.normal(k, (kh, kw, cin, cout), jnp.float32)
                / jnp.sqrt(kh * kw * cin))

    key, kb = jax.random.split(key)
    params = {"w_bneck": init_conv(kb, K, K, widths[0], widths[0]), "blocks": []}
    for i in range(len(widths) - 1):
        cin, cout = widths[i], widths[i + 1]
        cup = cin - 32
        key, ku, kc = jax.random.split(key, 3)
        params["blocks"].append({
            "w_up": init_conv(ku, 2, 2, cin, cup),         # (2,2,Cin,Cup)
            "w_conv": init_conv(kc, K, K, 2 * cup, cout),  # (K,K,Ccat,Cout)
        })
    key, ko = jax.random.split(key)
    params["w_out"] = (jax.random.normal(ko, (widths[-1], n_classes), jnp.float32)
                       / jnp.sqrt(widths[-1]))

    out = dictionary_model_forward(x_list, params, K)
    out = jax.block_until_ready(out)

    ref = dictionary_model_ref(x_list, params, K)
    assert out.shape == ref.shape, (out.shape, ref.shape)
    max_err = jnp.max(jnp.abs(out - ref))
    assert jnp.allclose(out, ref, rtol=3e-3, atol=3e-3), f"max abs err {max_err}"

    print("KERNEL_OK")
</pallas_src>

<mosaic_0001>
module attributes {stable_mosaic.version = 11 : i64} {
  func.func @bneck_kernel(%arg0: i32, %arg1: memref<1x8x8x64xf32, #tpu.memory_space<vmem>>, %arg2: memref<576x64xbf16, #tpu.memory_space<vmem>>, %arg3: memref<1x8x8x64xbf16, #tpu.memory_space<vmem>>, %arg4: memref<10x10x64xbf16, #tpu.memory_space<vmem>>) attributes {dimension_semantics = [#tpu.dimension_semantics<parallel>], iteration_bounds = array<i64: 2>, scalar_prefetch = 0 : i64, scratch_operands = 1 : i64, tpu.core_type = #tpu.core_type<tc>, window_params = [{transform_indices = @transform_0, window_bounds = array<i64: 1, 8, 8, 64>}, {pipeline_mode = #tpu.pipeline_mode<synchronous>, transform_indices = @transform_1, window_bounds = array<i64: 576, 64>}, {transform_indices = @transform_2, window_bounds = array<i64: 1, 8, 8, 64>}]} {
    %cst = arith.constant 0.000000e+00 : bf16
    %0 = vector.broadcast %cst : bf16 to vector<1x10x64xbf16>
    %c0 = arith.constant 0 : index
    %c0_0 = arith.constant 0 : index
    %c0_1 = arith.constant 0 : index
    %1 = vector.load %arg4[%c0, %c0_0, %c0_1] : memref<10x10x64xbf16, #tpu.memory_space<vmem>>, vector<1x10x64xbf16>
    tpu.vector_store %arg4[%c0, %c0_0, %c0_1], %0 {strides = array<i32>} : memref<10x10x64xbf16, #tpu.memory_space<vmem>>, vector<1x10x64xbf16>,
    %cst_2 = arith.constant 0.000000e+00 : bf16
    %2 = vector.broadcast %cst_2 : bf16 to vector<1x10x64xbf16>
    %c9 = arith.constant 9 : index
    %c0_3 = arith.constant 0 : index
    %c0_4 = arith.constant 0 : index
    %3 = vector.load %arg4[%c9, %c0_3, %c0_4] : memref<10x10x64xbf16, #tpu.memory_space<vmem>>, vector<1x10x64xbf16>
    tpu.vector_store %arg4[%c9, %c0_3, %c0_4], %2 {strides = array<i32>} : memref<10x10x64xbf16, #tpu.memory_space<vmem>>, vector<1x10x64xbf16>,
    %cst_5 = arith.constant 0.000000e+00 : bf16
    %4 = vector.broadcast %cst_5 : bf16 to vector<10x1x64xbf16>
    %c0_6 = arith.constant 0 : index
    %c0_7 = arith.constant 0 : index
    %c0_8 = arith.constant 0 : index
    %5 = vector.load %arg4[%c0_6, %c0_7, %c0_8] : memref<10x10x64xbf16, #tpu.memory_space<vmem>>, vector<10x1x64xbf16>
    tpu.vector_store %arg4[%c0_6, %c0_7, %c0_8], %4 {strides = array<i32>} : memref<10x10x64xbf16, #tpu.memory_space<vmem>>, vector<10x1x64xbf16>,
    %cst_9 = arith.constant 0.000000e+00 : bf16
    %6 = vector.broadcast %cst_9 : bf16 to vector<10x1x64xbf16>
    %c0_10 = arith.constant 0 : index
    %c9_11 = arith.constant 9 : index
    %c0_12 = arith.constant 0 : index
    %7 = vector.load %arg4[%c0_10, %c9_11, %c0_12] : memref<10x10x64xbf16, #tpu.memory_space<vmem>>, vector<10x1x64xbf16>
    tpu.vector_store %arg4[%c0_10, %c9_11, %c0_12], %6 {strides = array<i32>} : memref<10x10x64xbf16, #tpu.memory_space<vmem>>, vector<10x1x64xbf16>,
    %c0_13 = arith.constant 0 : index
    %c0_14 = arith.constant 0 : index
    %c0_15 = arith.constant 0 : index
    %c0_16 = arith.constant 0 : index
    %8 = vector.load %arg1[%c0_13, %c0_14, %c0_15, %c0_16] : memref<1x8x8x64xf32, #tpu.memory_space<vmem>>, vector<1x8x8x64xf32>
    %9 = vector.shape_cast %8 : vector<1x8x8x64xf32> to vector<8x8x64xf32>
    %10 = arith.truncf %9 : vector<8x8x64xf32> to vector<8x8x64xbf16>
    %c1 = arith.constant 1 : index
    %c1_17 = arith.constant 1 : index
    %c0_18 = arith.constant 0 : index
    %11 = vector.load %arg4[%c1, %c1_17, %c0_18] : memref<10x10x64xbf16, #tpu.memory_space<vmem>>, vector<8x8x64xbf16>
    tpu.vector_store %arg4[%c1, %c1_17, %c0_18], %10 {strides = array<i32>} : memref<10x10x64xbf16, #tpu.memory_space<vmem>>, vector<8x8x64xbf16>,
    %c0_19 = arith.constant 0 : index
    %c0_20 = arith.constant 0 : index
    %c0_21 = arith.constant 0 : index
    %12 = vector.load %arg4[%c0_19, %c0_20, %c0_21] : memref<10x10x64xbf16, #tpu.memory_space<vmem>>, vector<8x8x64xbf16>
    %c0_22 = arith.constant 0 : index
    %c1_23 = arith.constant 1 : index
    %c0_24 = arith.constant 0 : index
    %13 = vector.load %arg4[%c0_22, %c1_23, %c0_24] : memref<10x10x64xbf16, #tpu.memory_space<vmem>>, vector<8x8x64xbf16>
    %c0_25 = arith.constant 0 : index
    %c2 = arith.constant 2 : index
    %c0_26 = arith.constant 0 : index
    %14 = vector.load %arg4[%c0_25, %c2, %c0_26] : memref<10x10x64xbf16, #tpu.memory_space<vmem>>, vector<8x8x64xbf16>
    %c1_27 = arith.constant 1 : index
    %c0_28 = arith.constant 0 : index
    %c0_29 = arith.constant 0 : index
    %15 = vector.load %arg4[%c1_27, %c0_28, %c0_29] : memref<10x10x64xbf16, #tpu.memory_space<vmem>>, vector<8x8x64xbf16>
    %c1_30 = arith.constant 1 : index
    %c1_31 = arith.constant 1 : index
    %c0_32 = arith.constant 0 : index
    %16 = vector.load %arg4[%c1_30, %c1_31, %c0_32] : memref<10x10x64xbf16, #tpu.memory_space<vmem>>, vector<8x8x64xbf16>
    %c1_33 = arith.constant 1 : index
    %c2_34 = arith.constant 2 : index
    %c0_35 = arith.constant 0 : index
    %17 = vector.load %arg4[%c1_33, %c2_34, %c0_35] : memref<10x10x64xbf16, #tpu.memory_space<vmem>>, vector<8x8x64xbf16>
    %c2_36 = arith.constant 2 : index
    %c0_37 = arith.constant 0 : index
    %c0_38 = arith.constant 0 : index
    %18 = vector.load %arg4[%c2_36, %c0_37, %c0_38] : memref<10x10x64xbf16, #tpu.memory_space<vmem>>, vector<8x8x64xbf16>
    %c2_39 = arith.constant 2 : index
    %c1_40 = arith.constant 1 : index
    %c0_41 = arith.constant 0 : index
    %19 = vector.load %arg4[%c2_39, %c1_40, %c0_41] : memref<10x10x64xbf16, #tpu.memory_space<vmem>>, vector<8x8x64xbf16>
    %c2_42 = arith.constant 2 : index
    %c2_43 = arith.constant 2 : index
    %c0_44 = arith.constant 0 : index
    %20 = vector.load %arg4[%c2_42, %c2_43, %c0_44] : memref<10x10x64xbf16, #tpu.memory_space<vmem>>, vector<8x8x64xbf16>
    %21 = tpu.concatenate %12, %13, %14, %15, %16, %17, %18, %19, %20 in 2 : vector<8x8x64xbf16>, vector<8x8x64xbf16>, vector<8x8x64xbf16>, vector<8x8x64xbf16>, vector<8x8x64xbf16>, vector<8x8x64xbf16>, vector<8x8x64xbf16>, vector<8x8x64xbf16>, vector<8x8x64xbf16> -> vector<8x8x576xbf16>
    %22 = vector.shape_cast %21 : vector<8x8x576xbf16> to vector<64x576xbf16>
    %c0_45 = arith.constant 0 : index
    %c0_46 = arith.constant 0 : index
    %23 = vector.load %arg2[%c0_45, %c0_46] : memref<576x64xbf16, #tpu.memory_space<vmem>>, vector<576x64xbf16>
    %cst_47 = arith.constant dense<0.000000e+00> : vector<64x64xf32>
    %24 = tpu.matmul %22, %23, %cst_47 {dimension_numbers = #tpu.dot_dimension_numbers<[1], [0], [0], [1], [0, 0, 1, 1], [], []>} : vector<64x576xbf16>, vector<576x64xbf16>, vector<64x64xf32> -> vector<64x64xf32>
    %25 = vector.shape_cast %24 : vector<64x64xf32> to vector<8x8x64xf32>
    %26 = arith.truncf %25 : vector<8x8x64xf32> to vector<8x8x64xbf16>
    %c0_48 = arith.constant 0 : index
    %c0_49 = arith.constant 0 : index
    %c0_50 = arith.constant 0 : index
    %c0_51 = arith.constant 0 : index
    %27 = vector.load %arg3[%c0_48, %c0_49, %c0_50, %c0_51] : memref<1x8x8x64xbf16, #tpu.memory_space<vmem>>, vector<1x8x8x64xbf16>
    %28 = vector.shape_cast %27 : vector<1x8x8x64xbf16> to vector<8x8x64xbf16>
    %29 = vector.shape_cast %26 : vector<8x8x64xbf16> to vector<1x8x8x64xbf16>
    tpu.vector_store %arg3[%c0_48, %c0_49, %c0_50, %c0_51], %29 {strides = array<i32>} : memref<1x8x8x64xbf16, #tpu.memory_space<vmem>>, vector<1x8x8x64xbf16>,
    return
  }
  func.func @transform_0(%arg0: i32) -> (i32, i32, i32, i32) {
    %c0_i32 = arith.constant 0 : i32
    %c0_i32_0 = arith.constant 0 : i32
    %c0_i32_1 = arith.constant 0 : i32
    %c0_i32_2 = arith.constant 0 : i32
    return %arg0, %c0_i32, %c0_i32_0, %c0_i32_1 : i32, i32, i32, i32
  }
  func.func @transform_1(%arg0: i32) -> (i32, i32) {
    %c0_i32 = arith.constant 0 : i32
    %c0_i32_0 = arith.constant 0 : i32
    %c0_i32_1 = arith.constant 0 : i32
    return %c0_i32, %c0_i32_0 : i32, i32
  }
  func.func @transform_2(%arg0: i32) -> (i32, i32, i32, i32) {
    %c0_i32 = arith.constant 0 : i32
    %c0_i32_0 = arith.constant 0 : i32
    %c0_i32_1 = arith.constant 0 : i32
    %c0_i32_2 = arith.constant 0 : i32
    return %arg0, %c0_i32, %c0_i32_0, %c0_i32_1 : i32, i32, i32, i32
  }
}

</mosaic_0001>

<llo_original>
// kernel: tpu_custom_call.1
$region0: #{tpu_custom_call.1}
  #allocation0 [shape = 'u32[]', space=smem, size = 0x4, offset = 0x4, fixed_abs, tag = 'smem constant byte address 0x4 - core index']
  #allocation1 [shape = 'u32[144,128]{1,0:T(1,128)}', space=vmem, size = 0x12000, scoped, tag = 'internal scratch']
  #allocation2 [shape = 'bf16[10,10,64]{2,1,0:T(8,128)(2,1)}', space=vmem, size = 0xa000, scoped, tag = 'scratch operand']
  %s0 = inlined_call_operand.vmem [shape: f32[2,8,8,64], index: 0, kind: input, shape index: {}]
  %s1 = inlined_call_operand.vmem [shape: bf16[576,64], index: 1, kind: input, shape index: {}]
  %s2 = inlined_call_operand.hbm [shape: bf16[2,8,8,64], index: 2, kind: output, shape index: {}]
  %s3 = sld [smem:[#allocation0]]
  $region41: #{tpu_custom_call.1} parent=0
    _
  %s5 = ssub.s32 1, %s3
  %s6 = scalar_select 0, %s5, %s3
  $region1: #{tpu_custom_call.1} parent=0
    #allocation3 [shape = 'u8[32768]{0}', space=vmem, size = 0x8000, scoped, tag = 'output window, operand 0']
    #allocation4 [shape = 's32[2]{0}', space=sflag, size = 0x8, scoped, tag = 'scoped memory for tpu_custom_call.1']
    %7 = vsyncpa [#allocation4], 0
    %s8 = scalar_lea.sflag [#allocation4], 1
    %9 = vsyncpa %s8, 0
    loop: start=0, step=1, limit=4
    $region2: #{tpu_custom_call.1} parent=1 // loop_pre_header
      _
    $region3: #{tpu_custom_call.1} parent=1 // loop_header
      %s11 = sphi 0, %s15
      %p12 = scmp.ge.s32.totalorder %s11, 4
      %s21 = sphi 0, %s23
      %s24 = sphi 0, %s21
      %s25 = sphi 0, %s24
      %s41 = sphi 0, %s25
      %s45 = sphi 0, %s45
      %s47 = sphi 0, %s45
      %s48 = sphi 0, %s47
      %s62 = sphi 0, %s48
      %s68 = sphi 0, %s70
      %s71 = sphi 0, %s68
      %s72 = sphi 0, %s71
      %s88 = sphi 0, %s72
    $region4: #{tpu_custom_call.1} parent=1 // loop_header_branch
      %14 = sbr.rel (%p12) target = $region8
    $region5: #{tpu_custom_call.1} parent=1 // loop_body
      %s16 = ssub.s32 %s11, 1
      %s17 = ssub.s32 %s11, 2
      %s18 = sadd.s32 %s11, 1
      %s19 = ssub.s32 %s11, %s18
      %p20 = scmp.eq.s32.totalorder %s19, 0
      %s22 = sadd.s32 %s21, 1
      %s23 = scalar_select %p20, %s21, %s22
      %p26 = pneg %p20
      %p27 = scmp.eq.s32.totalorder %s11, 1
      %p28 = por %p26, %p27
      %p29 = scmp.ne.s32.totalorder %s21, %s24
      %p30 = scmp.eq.s32.totalorder %s11, 0
      %p31 = por %p29, %p30
      %p32 = scmp.ne.s32.totalorder %s21, %s24
      %p33 = scmp.eq.s32.totalorder %s16, 1
      %p34 = por %p32, %p33
      %p35 = scmp.ne.s32.totalorder %s24, %s25
      %p36 = scmp.eq.s32.totalorder %s16, 0
      %p37 = por %p35, %p36
      %p38 = scmp.ne.s32.totalorder %s24, %s25
      %p39 = scmp.eq.s32.totalorder %s17, 1
      %p40 = por %p38, %p39
      %p42 = scmp.ne.s32.totalorder %s25, %s41
      %p43 = scmp.eq.s32.totalorder %s17, 0
      %p44 = por %p42, %p43
      %s46 = sadd.s32 %s45, 1
      %p49 = scmp.eq.s32.totalorder %s11, 1
      %p50 = scmp.ne.s32.totalorder %s45, %s47
      %p51 = scmp.eq.s32.totalorder %s11, 0
      %p52 = por %p50, %p51
      %p53 = scmp.ne.s32.totalorder %s45, %s47
      %p54 = scmp.eq.s32.totalorder %s16, 1
      %p55 = por %p53, %p54
      %p56 = scmp.ne.s32.totalorder %s47, %s48
      %p57 = scmp.eq.s32.totalorder %s16, 0
      %p58 = por %p56, %p57
      %p59 = scmp.ne.s32.totalorder %s47, %s48
      %p60 = scmp.eq.s32.totalorder %s17, 1
      %p61 = por %p59, %p60
      %p63 = scmp.ne.s32.totalorder %s48, %s62
      %p64 = scmp.eq.s32.totalorder %s17, 0
      %p65 = por %p63, %p64
      %s66 = ssub.s32 %s11, %s18
      %p67 = scmp.eq.s32.totalorder %s66, 0
      %s69 = sadd.s32 %s68, 1
      %s70 = scalar_select %p67, %s68, %s69
      %p73 = pneg %p67
      %p74 = scmp.eq.s32.totalorder %s11, 1
      %p75 = por %p73, %p74
      %p76 = scmp.ne.s32.totalorder %s68, %s71
      %p77 = scmp.eq.s32.totalorder %s11, 0
      %p78 = por %p76, %p77
      %p79 = scmp.ne.s32.totalorder %s68, %s71
      %p80 = scmp.eq.s32.totalorder %s16, 1
      %p81 = por %p79, %p80
      %p82 = scmp.ne.s32.totalorder %s71, %s72
      %p83 = scmp.eq.s32.totalorder %s16, 0
      %p84 = por %p82, %p83
      %p85 = scmp.ne.s32.totalorder %s71, %s72
      %p86 = scmp.eq.s32.totalorder %s17, 1
      %p87 = por %p85, %p86
      %p89 = scmp.ne.s32.totalorder %s72, %s88
      %p90 = scmp.eq.s32.totalorder %s17, 0
      %p91 = por %p89, %p90
      %p92 = scmp.le.s32.totalorder 1, %s11
      %p93 = scmp.lt.s32.totalorder %s11, 3
      %p94 = pnand %p92, %p93
      %p95 = pneg %p94
      // Predicated region
      $region9: #{tpu_custom_call.1} parent=5 // pred_check
        _
      $region10: #{tpu_custom_call.1} parent=5 // pred_check_branch
        %97 = sbr.rel (%p94) target = $region12
      $region11: #{tpu_custom_call.1} parent=5 // pred_region
        %s98 = ssub.s32 %s11, 1
        // Predicated region
        $region13: #{tpu_custom_call.1} parent=11 // pred_check
          %p99 = pneg %p58
        $region14: #{tpu_custom_call.1} parent=11 // pred_check_branch
          %101 = sbr.rel (%p99) target = $region16
        $region15: #{tpu_custom_call.1} parent=11 // pred_region
          _
        $region16: #{tpu_custom_call.1} parent=11 // pred_fallthru
          _
      $region12: #{tpu_custom_call.1} parent=5 // pred_fallthru
        _
      %p102 = scmp.lt.s32.totalorder %s11, 2
      // Predicated region
      $region17: #{tpu_custom_call.1} parent=5 // pred_check
        %p103 = pneg %p102
      $region18: #{tpu_custom_call.1} parent=5 // pred_check_branch
        %105 = sbr.rel (%p103) target = $region20
      $region19: #{tpu_custom_call.1} parent=5 // pred_region
        // Predicated region
        $region21: #{tpu_custom_call.1} parent=19 // pred_check
          %p106 = pneg %p31
        $region22: #{tpu_custom_call.1} parent=19 // pred_check_branch
          %108 = sbr.rel (%p106) target = $region24
        $region23: #{tpu_custom_call.1} parent=19 // pred_region
          %p109 = scmp.lt.s32.totalorder %s11, 1
          %s110 = scalar_select %p109, %s11, 1
          %s111 = smul.addr %s110, 8
          %s112 = smul.addr %s111, 8
          %s113 = scalar_lea.vmem %s0, %s112
        $region24: #{tpu_custom_call.1} parent=19 // pred_fallthru
          _
      $region20: #{tpu_custom_call.1} parent=5 // pred_fallthru
        _
      %p114 = scmp.le.s32.totalorder 1, %s11
      %p115 = scmp.lt.s32.totalorder %s11, 3
      %p116 = pnand %p114, %p115
      %p117 = pneg %p116
      // Predicated region
      $region25: #{tpu_custom_call.1} parent=5 // pred_check
        _
      $region26: #{tpu_custom_call.1} parent=5 // pred_check_branch
        %119 = sbr.rel (%p116) target = $region28
      $region27: #{tpu_custom_call.1} parent=5 // pred_region
        %s120 = ssub.s32 %s11, 1
        %p121 = scmp.lt.s32.totalorder %s16, 1
        %s122 = scalar_select %p121, %s16, 1
        %s123 = smul.addr %s122, 8
        %s124 = smul.addr %s123, 8
        %s125 = scalar_lea.vmem %s0, %s124
        %p126 = pneg %p37
        %p127 = pneg %p34
        %p128 = pneg %p58
        %p129 = pneg %p55
        %p130 = pneg %p84
        %p131 = pneg %p81
        %s132 = sand.u32 %s71, 1
        %s133 = scalar_lea.sflag [#allocation4], %s132
        %s134 = sand.u32 %s71, 1
        %s135 = smul.addr %s134, 32
        %s136 = scalar_lea.vmem [#allocation3], %s135
        %p137 = scmp.lt.s32.totalorder %s16, 1
        %s138 = scalar_select %p137, %s16, 1
        %s139 = smul.addr %s138, 8
        %s140 = smul.addr %s139, 8
        %s141 = scalar_lea.vmem %s0, %s140
        %vm143 = vcmask 519168
        %144 = vst.msk [vmem:[#allocation2] sm:$0xf] %vm143, 0
        %vm145 = vcmask 516096
        %146 = vst.msk [vmem:[#allocation2 + $0x4] sm:$0x1] %vm145, 0
        %s147 = scalar_lea.vmem [#allocation2], 72
        %148 = vst.msk [vmem:[%s147] sm:$0xf] %vm143, 0
        %149 = vst.msk [vmem:[%s147 + $0x4] sm:$0x1] %vm145, 0
        %vm150 = vcmask 516096
        %vm151 = vsmask.f32 256
        %vm152 = vmand %vm150, %vm151
        %v153 = vld [vmem:[#allocation2] sm:$0x1]
        %v154 = vsel %vm152, 0, %v153
        %155 = vst [vmem:[#allocation2] sm:$0x1] %v154
        %v156 = vld [vmem:[#allocation2 + $0x8] sm:$0x1]
        %v157 = vsel %vm152, 0, %v156
        %158 = vst [vmem:[#allocation2 + $0x8] sm:$0x1] %v157
        %v159 = vld [vmem:[#allocation2 + $0x10] sm:$0x1]
        %v160 = vsel %vm152, 0, %v159
        %161 = vst [vmem:[#allocation2 + $0x10] sm:$0x1] %v160
        %v162 = vld [vmem:[#allocation2 + $0x18] sm:$0x1]
        %v163 = vsel %vm152, 0, %v162
        %164 = vst [vmem:[#allocation2 + $0x18] sm:$0x1] %v163
        %v165 = vld [vmem:[#allocation2 + $0x20] sm:$0x1]
        %v166 = vsel %vm152, 0, %v165
        %167 = vst [vmem:[#allocation2 + $0x20] sm:$0x1] %v166
        %v168 = vld [vmem:[#allocation2 + $0x28] sm:$0x1]
        %v169 = vsel %vm152, 0, %v168
        %170 = vst [vmem:[#allocation2 + $0x28] sm:$0x1] %v169
        %v171 = vld [vmem:[#allocation2 + $0x30] sm:$0x1]
        %v172 = vsel %vm152, 0, %v171
        %173 = vst [vmem:[#allocation2 + $0x30] sm:$0x1] %v172
        %v174 = vld [vmem:[#allocation2 + $0x38] sm:$0x1]
        %v175 = vsel %vm152, 0, %v174
        %176 = vst [vmem:[#allocation2 + $0x38] sm:$0x1] %v175
        %v177 = vld [vmem:[#allocation2 + $0x40] sm:$0x1]
        %v178 = vsel %vm152, 0, %v177
        %179 = vst [vmem:[#allocation2 + $0x40] sm:$0x1] %v178
        %v180 = vld [vmem:[#allocation2 + $0x48] sm:$0x1]
        %v181 = vsel %vm152, 0, %v180
        %182 = vst [vmem:[#allocation2 + $0x48] sm:$0x1] %v181
        %vm183 = vsmask.f32 7938
        %vm184 = vmand %vm150, %vm183
        %v185 = vld [vmem:[#allocation2 + $0x4] sm:$0x1]
        %v186 = vsel %vm184, 0, %v185
        %187 = vst [vmem:[#allocation2 + $0x4] sm:$0x1] %v186
        %v188 = vld [vmem:[#allocation2 + $0xc] sm:$0x1]
        %v189 = vsel %vm184, 0, %v188
        %190 = vst [vmem:[#allocation2 + $0xc] sm:$0x1] %v189
        %v191 = vld [vmem:[#allocation2 + $0x14] sm:$0x1]
        %v192 = vsel %vm184, 0, %v191
        %193 = vst [vmem:[#allocation2 + $0x14] sm:$0x1] %v192
        %v194 = vld [vmem:[#allocation2 + $0x1c] sm:$0x1]
        %v195 = vsel %vm184, 0, %v194
        %196 = vst [vmem:[#allocation2 + $0x1c] sm:$0x1] %v195
        %v197 = vld [vmem:[#allocation2 + $0x24] sm:$0x1]
        %v198 = vsel %vm184, 0, %v197
        %199 = vst [vmem:[#allocation2 + $0x24] sm:$0x1] %v198
        %v200 = vld [vmem:[#allocation2 + $0x2c] sm:$0x1]
        %v201 = vsel %vm184, 0, %v200
        %202 = vst [vmem:[#allocation2 + $0x2c] sm:$0x1] %v201
        %v203 = vld [vmem:[#allocation2 + $0x34] sm:$0x1]
        %v204 = vsel %vm184, 0, %v203
        %205 = vst [vmem:[#allocation2 + $0x34] sm:$0x1] %v204
        %v206 = vld [vmem:[#allocation2 + $0x3c] sm:$0x1]
        %v207 = vsel %vm184, 0, %v206
        %208 = vst [vmem:[#allocation2 + $0x3c] sm:$0x1] %v207
        %v209 = vld [vmem:[#allocation2 + $0x44] sm:$0x1]
        %v210 = vsel %vm184, 0, %v209
        %211 = vst [vmem:[#allocation2 + $0x44] sm:$0x1] %v210
        %v212 = vld [vmem:[#allocation2 + $0x4c] sm:$0x1]
        %v213 = vsel %vm184, 0, %v212
        %214 = vst [vmem:[#allocation2 + $0x4c] sm:$0x1] %v213
        %v215 = vld [vmem:[%s141] sm:$0xff]
        %v216 = vld [vmem:[%s141 + $0x8] sm:$0xff]
        %v217 = vld [vmem:[%s141 + $0x10] sm:$0xff]
        %v218 = vld [vmem:[%s141 + $0x18] sm:$0xff]
        %v219 = vld [vmem:[%s141 + $0x20] sm:$0xff]
        %v220 = vld [vmem:[%s141 + $0x28] sm:$0xff]
        %v221 = vld [vmem:[%s141 + $0x30] sm:$0xff]
        %v222 = vld [vmem:[%s141 + $0x38] sm:$0xff]
        %v223 = vpack.c.bf16 %v215, %v215
        %v224 = vpack.c.bf16 %v216, %v216
        %v225 = vpack.c.bf16 %v217, %v217
        %v226 = vpack.c.bf16 %v218, %v218
        %v227 = vpack.c.bf16 %v219, %v219
        %v228 = vpack.c.bf16 %v220, %v220
        %v229 = vpack.c.bf16 %v221, %v221
        %v230 = vpack.c.bf16 %v222, %v222
        %v239 = vunpack.c.l.b16 %v223
        %v240 = vunpack.c.l.b16 %v224
        %v241 = vunpack.c.l.b16 %v225
        %v242 = vunpack.c.l.b16 %v226
        %v243 = vunpack.c.l.b16 %v227
        %v244 = vunpack.c.l.b16 %v228
        %v245 = vunpack.c.l.b16 %v229
        %v246 = vunpack.c.l.b16 %v230
        %v247 = vpack.c.b16 %v239, %v239
        %v248 = vpack.c.b16 %v240, %v240
        %v249 = vpack.c.b16 %v241, %v241
        %v250 = vpack.c.b16 %v242, %v242
        %v251 = vpack.c.b16 %v243, %v243
        %v252 = vpack.c.b16 %v244, %v244
        %v253 = vpack.c.b16 %v245, %v245
        %v254 = vpack.c.b16 %v246, %v246
        %v256 = vshrl.u32 %v247, 16
        %v258 = vrot.slane %v256, 7
        %v259 = vshll.u32 %v247, 16
        %v261 = vor.u32 %v258, %v259
        %v262 = vrot.slane %v258, 4
        %v264 = vshrl.u32 %v248, 16
        %v266 = vrot.slane %v264, 7
        %v267 = vshll.u32 %v248, 16
        %v269 = vor.u32 %v266, %v267
        %v270 = vrot.slane %v266, 4
        %v272 = vshrl.u32 %v249, 16
        %v274 = vrot.slane %v272, 7
        %v275 = vshll.u32 %v249, 16
        %v277 = vor.u32 %v274, %v275
        %v278 = vrot.slane %v274, 4
        %v280 = vshrl.u32 %v250, 16
        %v282 = vrot.slane %v280, 7
        %v283 = vshll.u32 %v250, 16
        %v285 = vor.u32 %v282, %v283
        %v286 = vrot.slane %v282, 4
        %v288 = vshrl.u32 %v251, 16
        %v290 = vrot.slane %v288, 7
        %v291 = vshll.u32 %v251, 16
        %v293 = vor.u32 %v290, %v291
        %v294 = vrot.slane %v290, 4
        %v296 = vshrl.u32 %v252, 16
        %v298 = vrot.slane %v296, 7
        %v299 = vshll.u32 %v252, 16
        %v301 = vor.u32 %v298, %v299
        %v302 = vrot.slane %v298, 4
        %v304 = vshrl.u32 %v253, 16
        %v306 = vrot.slane %v304, 7
        %v307 = vshll.u32 %v253, 16
        %v309 = vor.u32 %v306, %v307
        %v310 = vrot.slane %v306, 4
        %v312 = vshrl.u32 %v254, 16
        %v314 = vrot.slane %v312, 7
        %v315 = vshll.u32 %v254, 16
        %v317 = vor.u32 %v314, %v315
        %v318 = vrot.slane %v314, 4
        %s335 = scalar_lea.vmem [#allocation2], 8
        %vm336 = vcmask 519168
        %vm337 = vmand %vm336, %vm183
        %v338 = vld [vmem:[%s335] sm:$0xf]
        %v339 = vsel %vm337, %v261, %v338
        %340 = vst [vmem:[%s335] sm:$0xf] %v339
        %v341 = vld [vmem:[%s335 + $0x4] sm:$0x1]
        %v342 = vsel %vm152, %v262, %v341
        %343 = vst [vmem:[%s335 + $0x4] sm:$0x1] %v342
        %v344 = vld [vmem:[%s335 + $0x8] sm:$0xf]
        %v345 = vsel %vm337, %v269, %v344
        %346 = vst [vmem:[%s335 + $0x8] sm:$0xf] %v345
        %v347 = vld [vmem:[%s335 + $0xc] sm:$0x1]
        %v348 = vsel %vm152, %v270, %v347
        %349 = vst [vmem:[%s335 + $0xc] sm:$0x1] %v348
        %v350 = vld [vmem:[%s335 + $0x10] sm:$0xf]
        %v351 = vsel %vm337, %v277, %v350
        %352 = vst [vmem:[%s335 + $0x10] sm:$0xf] %v351
        %v353 = vld [vmem:[%s335 + $0x14] sm:$0x1]
        %v354 = vsel %vm152, %v278, %v353
        %355 = vst [vmem:[%s335 + $0x14] sm:$0x1] %v354
        %v356 = vld [vmem:[%s335 + $0x18] sm:$0xf]
        %v357 = vsel %vm337, %v285, %v356
        %358 = vst [vmem:[%s335 + $0x18] sm:$0xf] %v357
        %v359 = vld [vmem:[%s335 + $0x1c] sm:$0x1]
        %v360 = vsel %vm152, %v286, %v359
        %361 = vst [vmem:[%s335 + $0x1c] sm:$0x1] %v360
        %v362 = vld [vmem:[%s335 + $0x20] sm:$0xf]
        %v363 = vsel %vm337, %v293, %v362
        %364 = vst [vmem:[%s335 + $0x20] sm:$0xf] %v363
        %v365 = vld [vmem:[%s335 + $0x24] sm:$0x1]
        %v366 = vsel %vm152, %v294, %v365
        %367 = vst [vmem:[%s335 + $0x24] sm:$0x1] %v366
        %v368 = vld [vmem:[%s335 + $0x28] sm:$0xf]
        %v369 = vsel %vm337, %v301, %v368
        %370 = vst [vmem:[%s335 + $0x28] sm:$0xf] %v369
        %v371 = vld [vmem:[%s335 + $0x2c] sm:$0x1]
        %v372 = vsel %vm152, %v302, %v371
        %373 = vst [vmem:[%s335 + $0x2c] sm:$0x1] %v372
        %v374 = vld [vmem:[%s335 + $0x30] sm:$0xf]
        %v375 = vsel %vm337, %v309, %v374
        %376 = vst [vmem:[%s335 + $0x30] sm:$0xf] %v375
        %v377 = vld [vmem:[%s335 + $0x34] sm:$0x1]
        %v378 = vsel %vm152, %v310, %v377
        %379 = vst [vmem:[%s335 + $0x34] sm:$0x1] %v378
        %v380 = vld [vmem:[%s335 + $0x38] sm:$0xf]
        %v381 = vsel %vm337, %v317, %v380
        %382 = vst [vmem:[%s335 + $0x38] sm:$0xf] %v381
        %v383 = vld [vmem:[%s335 + $0x3c] sm:$0x1]
        %v384 = vsel %vm152, %v318, %v383
        %385 = vst [vmem:[%s335 + $0x3c] sm:$0x1] %v384
        %v386 = vld [vmem:[#allocation2] sm:$0xf]
        %v387 = vld [vmem:[#allocation2 + $0x8] sm:$0xf]
        %v388 = vld [vmem:[#allocation2 + $0x10] sm:$0xf]
        %v389 = vld [vmem:[#allocation2 + $0x18] sm:$0xf]
        %v390 = vld [vmem:[#allocation2 + $0x20] sm:$0xf]
        %v391 = vld [vmem:[#allocation2 + $0x28] sm:$0xf]
        %v392 = vld [vmem:[#allocation2 + $0x30] sm:$0xf]
        %v393 = vld [vmem:[#allocation2 + $0x38] sm:$0xf]
        %v394 = vld [vmem:[#allocation2 + $0x4] sm:$0x1]
        %v395 = vld [vmem:[#allocation2 + $0xc] sm:$0x1]
        %v396 = vld [vmem:[#allocation2 + $0x14] sm:$0x1]
        %v397 = vld [vmem:[#allocation2 + $0x1c] sm:$0x1]
        %v398 = vld [vmem:[#allocation2 + $0x24] sm:$0x1]
        %v399 = vld [vmem:[#allocation2 + $0x2c] sm:$0x1]
        %v400 = vld [vmem:[#allocation2 + $0x34] sm:$0x1]
        %v401 = vld [vmem:[#allocation2 + $0x3c] sm:$0x1]
        %v402 = vld [vmem:[#allocation2] sm:$0xe]
        %v403 = vld [vmem:[#allocation2 + $0x8] sm:$0xe]
        %v404 = vld [vmem:[#allocation2 + $0x10] sm:$0xe]
        %v405 = vld [vmem:[#allocation2 + $0x18] sm:$0xe]
        %v406 = vld [vmem:[#allocation2 + $0x20] sm:$0xe]
        %v407 = vld [vmem:[#allocation2 + $0x28] sm:$0xe]
        %v408 = vld [vmem:[#allocation2 + $0x30] sm:$0xe]
        %v409 = vld [vmem:[#allocation2 + $0x38] sm:$0xe]
        %v410 = vld [vmem:[%s335] sm:$0xf]
        %v411 = vld [vmem:[%s335 + $0x8] sm:$0xf]
        %v412 = vld [vmem:[%s335 + $0x10] sm:$0xf]
        %v413 = vld [vmem:[%s335 + $0x18] sm:$0xf]
        %v414 = vld [vmem:[%s335 + $0x20] sm:$0xf]
        %v415 = vld [vmem:[%s335 + $0x28] sm:$0xf]
        %v416 = vld [vmem:[%s335 + $0x30] sm:$0xf]
        %v417 = vld [vmem:[%s335 + $0x38] sm:$0xf]
        %v418 = vld [vmem:[%s335 + $0x4] sm:$0x1]
        %v419 = vld [vmem:[%s335 + $0xc] sm:$0x1]
        %v420 = vld [vmem:[%s335 + $0x14] sm:$0x1]
        %v421 = vld [vmem:[%s335 + $0x1c] sm:$0x1]
        %v422 = vld [vmem:[%s335 + $0x24] sm:$0x1]
        %v423 = vld [vmem:[%s335 + $0x2c] sm:$0x1]
        %v424 = vld [vmem:[%s335 + $0x34] sm:$0x1]
        %v425 = vld [vmem:[%s335 + $0x3c] sm:$0x1]
        %v426 = vld [vmem:[%s335] sm:$0xe]
        %v427 = vld [vmem:[%s335 + $0x8] sm:$0xe]
        %v428 = vld [vmem:[%s335 + $0x10] sm:$0xe]
        %v429 = vld [vmem:[%s335 + $0x18] sm:$0xe]
        %v430 = vld [vmem:[%s335 + $0x20] sm:$0xe]
        %v431 = vld [vmem:[%s335 + $0x28] sm:$0xe]
        %v432 = vld [vmem:[%s335 + $0x30] sm:$0xe]
        %v433 = vld [vmem:[%s335 + $0x38] sm:$0xe]
        %s434 = scalar_lea.vmem [#allocation2], 16
        %v435 = vld [vmem:[%s434] sm:$0xf]
        %v436 = vld [vmem:[%s434 + $0x8] sm:$0xf]
        %v437 = vld [vmem:[%s434 + $0x10] sm:$0xf]
        %v438 = vld [vmem:[%s434 + $0x18] sm:$0xf]
        %v439 = vld [vmem:[%s434 + $0x20] sm:$0xf]
        %v440 = vld [vmem:[%s434 + $0x28] sm:$0xf]
        %v441 = vld [vmem:[%s434 + $0x30] sm:$0xf]
        %v442 = vld [vmem:[%s434 + $0x38] sm:$0xf]
        %v443 = vld [vmem:[%s434 + $0x4] sm:$0x1]
        %v444 = vld [vmem:[%s434 + $0xc] sm:$0x1]
        %v445 = vld [vmem:[%s434 + $0x14] sm:$0x1]
        %v446 = vld [vmem:[%s434 + $0x1c] sm:$0x1]
        %v447 = vld [vmem:[%s434 + $0x24] sm:$0x1]
        %v448 = vld [vmem:[%s434 + $0x2c] sm:$0x1]
        %v449 = vld [vmem:[%s434 + $0x34] sm:$0x1]
        %v450 = vld [vmem:[%s434 + $0x3c] sm:$0x1]
        %v451 = vld [vmem:[%s434] sm:$0xe]
        %v452 = vld [vmem:[%s434 + $0x8] sm:$0xe]
        %v453 = vld [vmem:[%s434 + $0x10] sm:$0xe]
        %v454 = vld [vmem:[%s434 + $0x18] sm:$0xe]
        %v455 = vld [vmem:[%s434 + $0x20] sm:$0xe]
        %v456 = vld [vmem:[%s434 + $0x28] sm:$0xe]
        %v457 = vld [vmem:[%s434 + $0x30] sm:$0xe]
        %v458 = vld [vmem:[%s434 + $0x38] sm:$0xe]
        %v475 = vunpack.c.l.b16 %v386
        %v476 = vunpack.c.l.b16 %v394
        %v477 = vunpack.c.l.b16 %v387
        %v478 = vunpack.c.l.b16 %v395
        %v479 = vunpack.c.l.b16 %v388
        %v480 = vunpack.c.l.b16 %v396
        %v481 = vunpack.c.l.b16 %v389
        %v482 = vunpack.c.l.b16 %v397
        %v483 = vunpack.c.l.b16 %v390
        %v484 = vunpack.c.l.b16 %v398
        %v485 = vunpack.c.l.b16 %v391
        %v486 = vunpack.c.l.b16 %v399
        %v487 = vunpack.c.l.b16 %v392
        %v488 = vunpack.c.l.b16 %v400
        %v489 = vunpack.c.l.b16 %v393
        %v490 = vunpack.c.l.b16 %v401
        %v491 = vpack.c.b16 %v476, %v475
        %v492 = vpack.c.b16 %v478, %v477
        %v493 = vpack.c.b16 %v480, %v479
        %v494 = vpack.c.b16 %v482, %v481
        %v495 = vpack.c.b16 %v484, %v483
        %v496 = vpack.c.b16 %v486, %v485
        %v497 = vpack.c.b16 %v488, %v487
        %v498 = vpack.c.b16 %v490, %v489
        %v500 = vshrl.u32 %v491, 16
        %v502 = vshll.u32 %v491, 16
        %v504 = vrot.slane %v502, 1
        %v505 = vor.u32 %v500, %v504
        %v507 = vshrl.u32 %v492, 16
        %v509 = vshll.u32 %v492, 16
        %v511 = vrot.slane %v509, 1
        %v512 = vor.u32 %v507, %v511
        %v514 = vshrl.u32 %v493, 16
        %v516 = vshll.u32 %v493, 16
        %v518 = vrot.slane %v516, 1
        %v519 = vor.u32 %v514, %v518
        %v521 = vshrl.u32 %v494, 16
        %v523 = vshll.u32 %v494, 16
        %v525 = vrot.slane %v523, 1
        %v526 = vor.u32 %v521, %v525
        %v528 = vshrl.u32 %v495, 16
        %v530 = vshll.u32 %v495, 16
        %v532 = vrot.slane %v530, 1
        %v533 = vor.u32 %v528, %v532
        %v535 = vshrl.u32 %v496, 16
        %v537 = vshll.u32 %v496, 16
        %v539 = vrot.slane %v537, 1
        %v540 = vor.u32 %v535, %v539
        %v542 = vshrl.u32 %v497, 16
        %v544 = vshll.u32 %v497, 16
        %v546 = vrot.slane %v544, 1
        %v547 = vor.u32 %v542, %v546
        %v549 = vshrl.u32 %v498, 16
        %v551 = vshll.u32 %v498, 16
        %v553 = vrot.slane %v551, 1
        %v554 = vor.u32 %v549, %v553
        %555 = vrot.lane.b32.xlu0 %v505, 64
        %v556 = vpop.permute.xlu0 %555
        %557 = vrot.lane.b32.xlu0 %v512, 64
        %v558 = vpop.permute.xlu0 %557
        %559 = vrot.lane.b32.xlu0 %v519, 64
        %v560 = vpop.permute.xlu0 %559
        %561 = vrot.lane.b32.xlu0 %v526, 64
        %v562 = vpop.permute.xlu0 %561
        %563 = vrot.lane.b32.xlu0 %v533, 64
        %v564 = vpop.permute.xlu0 %563
        %565 = vrot.lane.b32.xlu0 %v540, 64
        %v566 = vpop.permute.xlu0 %565
        %567 = vrot.lane.b32.xlu0 %v547, 64
        %v568 = vpop.permute.xlu0 %567
        %569 = vrot.lane.b32.xlu0 %v554, 64
        %v570 = vpop.permute.xlu0 %569
        %v579 = vunpack.c.l.b16 %v402
        %v580 = vunpack.c.l.b16 %v403
        %v581 = vunpack.c.l.b16 %v404
        %v582 = vunpack.c.l.b16 %v405
        %v583 = vunpack.c.l.b16 %v406
        %v584 = vunpack.c.l.b16 %v407
        %v585 = vunpack.c.l.b16 %v408
        %v586 = vunpack.c.l.b16 %v409
        %v587 = vpack.c.b16 %v476, %v579
        %v588 = vpack.c.b16 %v478, %v580
        %v589 = vpack.c.b16 %v480, %v581
        %v590 = vpack.c.b16 %v482, %v582
        %v591 = vpack.c.b16 %v484, %v583
        %v592 = vpack.c.b16 %v486, %v584
        %v593 = vpack.c.b16 %v488, %v585
        %v594 = vpack.c.b16 %v490, %v586
        %v595 = vrot.slane %v587, 1
        %v596 = vrot.slane %v588, 1
        %v597 = vrot.slane %v589, 1
        %v598 = vrot.slane %v590, 1
        %v599 = vrot.slane %v591, 1
        %v600 = vrot.slane %v592, 1
        %v601 = vrot.slane %v593, 1
        %v602 = vrot.slane %v594, 1
        %v611 = vunpack.c.l.b16 %v410
        %v612 = vunpack.c.l.b16 %v411
        %v613 = vunpack.c.l.b16 %v412
        %v614 = vunpack.c.l.b16 %v413
        %v615 = vunpack.c.l.b16 %v414
        %v616 = vunpack.c.l.b16 %v415
        %v617 = vunpack.c.l.b16 %v416
        %v618 = vunpack.c.l.b16 %v417
        %v619 = vpack.c.b16 %v611, %v611
        %v620 = vpack.c.b16 %v612, %v612
        %v621 = vpack.c.b16 %v613, %v613
        %v622 = vpack.c.b16 %v614, %v614
        %v623 = vpack.c.b16 %v615, %v615
        %v624 = vpack.c.b16 %v616, %v616
        %v625 = vpack.c.b16 %v617, %v617
        %v626 = vpack.c.b16 %v618, %v618
        %627 = vrot.lane.b32.xlu0 %v619, 64
        %v628 = vpop.permute.xlu0 %627
        %629 = vrot.lane.b32.xlu0 %v620, 64
        %v630 = vpop.permute.xlu0 %629
        %631 = vrot.lane.b32.xlu0 %v621, 64
        %v632 = vpop.permute.xlu0 %631
        %633 = vrot.lane.b32.xlu0 %v622, 64
        %v634 = vpop.permute.xlu0 %633
        %635 = vrot.lane.b32.xlu0 %v623, 64
        %v636 = vpop.permute.xlu0 %635
        %637 = vrot.lane.b32.xlu0 %v624, 64
        %v638 = vpop.permute.xlu0 %637
        %639 = vrot.lane.b32.xlu0 %v625, 64
        %v640 = vpop.permute.xlu0 %639
        %641 = vrot.lane.b32.xlu0 %v626, 64
        %v642 = vpop.permute.xlu0 %641
        %v651 = vunpack.c.l.b16 %v418
        %v652 = vunpack.c.l.b16 %v419
        %v653 = vunpack.c.l.b16 %v420
        %v654 = vunpack.c.l.b16 %v421
        %v655 = vunpack.c.l.b16 %v422
        %v656 = vunpack.c.l.b16 %v423
        %v657 = vunpack.c.l.b16 %v424
        %v658 = vunpack.c.l.b16 %v425
        %v659 = vpack.c.b16 %v651, %v611
        %v660 = vpack.c.b16 %v652, %v612
        %v661 = vpack.c.b16 %v653, %v613
        %v662 = vpack.c.b16 %v654, %v614
        %v663 = vpack.c.b16 %v655, %v615
        %v664 = vpack.c.b16 %v656, %v616
        %v665 = vpack.c.b16 %v657, %v617
        %v666 = vpack.c.b16 %v658, %v618
        %v668 = vshrl.u32 %v659, 16
        %v670 = vshll.u32 %v659, 16
        %v672 = vrot.slane %v670, 1
        %v673 = vor.u32 %v668, %v672
        %v675 = vshrl.u32 %v660, 16
        %v677 = vshll.u32 %v660, 16
        %v679 = vrot.slane %v677, 1
        %v680 = vor.u32 %v675, %v679
        %v682 = vshrl.u32 %v661, 16
        %v684 = vshll.u32 %v661, 16
        %v686 = vrot.slane %v684, 1
        %v687 = vor.u32 %v682, %v686
        %v689 = vshrl.u32 %v662, 16
        %v691 = vshll.u32 %v662, 16
        %v693 = vrot.slane %v691, 1
        %v694 = vor.u32 %v689, %v693
        %v696 = vshrl.u32 %v663, 16
        %v698 = vshll.u32 %v663, 16
        %v700 = vrot.slane %v698, 1
        %v701 = vor.u32 %v696, %v700
        %v703 = vshrl.u32 %v664, 16
        %v705 = vshll.u32 %v664, 16
        %v707 = vrot.slane %v705, 1
        %v708 = vor.u32 %v703, %v707
        %v710 = vshrl.u32 %v665, 16
        %v712 = vshll.u32 %v665, 16
        %v714 = vrot.slane %v712, 1
        %v715 = vor.u32 %v710, %v714
        %v717 = vshrl.u32 %v666, 16
        %v719 = vshll.u32 %v666, 16
        %v721 = vrot.slane %v719, 1
        %v722 = vor.u32 %v717, %v721
        %v731 = vunpack.c.l.b16 %v426
        %v732 = vunpack.c.l.b16 %v427
        %v733 = vunpack.c.l.b16 %v428
        %v734 = vunpack.c.l.b16 %v429
        %v735 = vunpack.c.l.b16 %v430
        %v736 = vunpack.c.l.b16 %v431
        %v737 = vunpack.c.l.b16 %v432
        %v738 = vunpack.c.l.b16 %v433
        %v739 = vpack.c.b16 %v651, %v731
        %v740 = vpack.c.b16 %v652, %v732
        %v741 = vpack.c.b16 %v653, %v733
        %v742 = vpack.c.b16 %v654, %v734
        %v743 = vpack.c.b16 %v655, %v735
        %v744 = vpack.c.b16 %v656, %v736
        %v745 = vpack.c.b16 %v657, %v737
        %v746 = vpack.c.b16 %v658, %v738
        %v747 = vrot.slane %v739, 1
        %v748 = vrot.slane %v740, 1
        %v749 = vrot.slane %v741, 1
        %v750 = vrot.slane %v742, 1
        %v751 = vrot.slane %v743, 1
        %v752 = vrot.slane %v744, 1
        %v753 = vrot.slane %v745, 1
        %v754 = vrot.slane %v746, 1
        %755 = vrot.lane.b32.xlu0 %v747, 64
        %v756 = vpop.permute.xlu0 %755
        %757 = vrot.lane.b32.xlu0 %v748, 64
        %v758 = vpop.permute.xlu0 %757
        %759 = vrot.lane.b32.xlu0 %v749, 64
        %v760 = vpop.permute.xlu0 %759
        %761 = vrot.lane.b32.xlu0 %v750, 64
        %v762 = vpop.permute.xlu0 %761
        %763 = vrot.lane.b32.xlu0 %v751, 64
        %v764 = vpop.permute.xlu0 %763
        %765 = vrot.lane.b32.xlu0 %v752, 64
        %v766 = vpop.permute.xlu0 %765
        %767 = vrot.lane.b32.xlu0 %v753, 64
        %v768 = vpop.permute.xlu0 %767
        %769 = vrot.lane.b32.xlu0 %v754, 64
        %v770 = vpop.permute.xlu0 %769
        %v787 = vunpack.c.l.b16 %v435
        %v788 = vunpack.c.l.b16 %v443
        %v789 = vunpack.c.l.b16 %v436
        %v790 = vunpack.c.l.b16 %v444
        %v791 = vunpack.c.l.b16 %v437
        %v792 = vunpack.c.l.b16 %v445
        %v793 = vunpack.c.l.b16 %v438
        %v794 = vunpack.c.l.b16 %v446
        %v795 = vunpack.c.l.b16 %v439
        %v796 = vunpack.c.l.b16 %v447
        %v797 = vunpack.c.l.b16 %v440
        %v798 = vunpack.c.l.b16 %v448
        %v799 = vunpack.c.l.b16 %v441
        %v800 = vunpack.c.l.b16 %v449
        %v801 = vunpack.c.l.b16 %v442
        %v802 = vunpack.c.l.b16 %v450
        %v803 = vpack.c.b16 %v788, %v787
        %v804 = vpack.c.b16 %v790, %v789
        %v805 = vpack.c.b16 %v792, %v791
        %v806 = vpack.c.b16 %v794, %v793
        %v807 = vpack.c.b16 %v796, %v795
        %v808 = vpack.c.b16 %v798, %v797
        %v809 = vpack.c.b16 %v800, %v799
        %v810 = vpack.c.b16 %v802, %v801
        %v812 = vshrl.u32 %v803, 16
        %v814 = vshll.u32 %v803, 16
        %v816 = vrot.slane %v814, 1
        %v817 = vor.u32 %v812, %v816
        %v819 = vshrl.u32 %v804, 16
        %v821 = vshll.u32 %v804, 16
        %v823 = vrot.slane %v821, 1
        %v824 = vor.u32 %v819, %v823
        %v826 = vshrl.u32 %v805, 16
        %v828 = vshll.u32 %v805, 16
        %v830 = vrot.slane %v828, 1
        %v831 = vor.u32 %v826, %v830
        %v833 = vshrl.u32 %v806, 16
        %v835 = vshll.u32 %v806, 16
        %v837 = vrot.slane %v835, 1
        %v838 = vor.u32 %v833, %v837
        %v840 = vshrl.u32 %v807, 16
        %v842 = vshll.u32 %v807, 16
        %v844 = vrot.slane %v842, 1
        %v845 = vor.u32 %v840, %v844
        %v847 = vshrl.u32 %v808, 16
        %v849 = vshll.u32 %v808, 16
        %v851 = vrot.slane %v849, 1
        %v852 = vor.u32 %v847, %v851
        %v854 = vshrl.u32 %v809, 16
        %v856 = vshll.u32 %v809, 16
        %v858 = vrot.slane %v856, 1
        %v859 = vor.u32 %v854, %v858
        %v861 = vshrl.u32 %v810, 16
        %v863 = vshll.u32 %v810, 16
        %v865 = vrot.slane %v863, 1
        %v866 = vor.u32 %v861, %v865
        %867 = vrot.lane.b32.xlu0 %v817, 64
        %v868 = vpop.permute.xlu0 %867
        %869 = vrot.lane.b32.xlu0 %v824, 64
        %v870 = vpop.permute.xlu0 %869
        %871 = vrot.lane.b32.xlu0 %v831, 64
        %v872 = vpop.permute.xlu0 %871
        %873 = vrot.lane.b32.xlu0 %v838, 64
        %v874 = vpop.permute.xlu0 %873
        %875 = vrot.lane.b32.xlu0 %v845, 64
        %v876 = vpop.permute.xlu0 %875
        %877 = vrot.lane.b32.xlu0 %v852, 64
        %v878 = vpop.permute.xlu0 %877
        %879 = vrot.lane.b32.xlu0 %v859, 64
        %v880 = vpop.permute.xlu0 %879
        %881 = vrot.lane.b32.xlu0 %v866, 64
        %v882 = vpop.permute.xlu0 %881
        %v891 = vunpack.c.l.b16 %v451
        %v892 = vunpack.c.l.b16 %v452
        %v893 = vunpack.c.l.b16 %v453
        %v894 = vunpack.c.l.b16 %v454
        %v895 = vunpack.c.l.b16 %v455
        %v896 = vunpack.c.l.b16 %v456
        %v897 = vunpack.c.l.b16 %v457
        %v898 = vunpack.c.l.b16 %v458
        %v899 = vpack.c.b16 %v788, %v891
        %v900 = vpack.c.b16 %v790, %v892
        %v901 = vpack.c.b16 %v792, %v893
        %v902 = vpack.c.b16 %v794, %v894
        %v903 = vpack.c.b16 %v796, %v895
        %v904 = vpack.c.b16 %v798, %v896
        %v905 = vpack.c.b16 %v800, %v897
        %v906 = vpack.c.b16 %v802, %v898
        %v907 = vrot.slane %v899, 1
        %v908 = vrot.slane %v900, 1
        %v909 = vrot.slane %v901, 1
        %v910 = vrot.slane %v902, 1
        %v911 = vrot.slane %v903, 1
        %v912 = vrot.slane %v904, 1
        %v913 = vrot.slane %v905, 1
        %v914 = vrot.slane %v906, 1
        %vm915 = vcmask 523264
        %v918 = vsel %vm915, %v386, %v556
        %v921 = vsel %vm915, %v387, %v558
        %v924 = vsel %vm915, %v388, %v560
        %v927 = vsel %vm915, %v389, %v562
        %v930 = vsel %vm915, %v390, %v564
        %v933 = vsel %vm915, %v391, %v566
        %v936 = vsel %vm915, %v392, %v568
        %v939 = vsel %vm915, %v393, %v570
        %v942 = vsel %vm915, %v595, %v628
        %v945 = vsel %vm915, %v596, %v630
        %v948 = vsel %vm915, %v597, %v632
        %v951 = vsel %vm915, %v598, %v634
        %v954 = vsel %vm915, %v599, %v636
        %v957 = vsel %vm915, %v600, %v638
        %v960 = vsel %vm915, %v601, %v640
        %v963 = vsel %vm915, %v602, %v642
        %v966 = vsel %vm915, %v673, %v756
        %v969 = vsel %vm915, %v680, %v758
        %v972 = vsel %vm915, %v687, %v760
        %v975 = vsel %vm915, %v694, %v762
        %v978 = vsel %vm915, %v701, %v764
        %v981 = vsel %vm915, %v708, %v766
        %v984 = vsel %vm915, %v715, %v768
        %v987 = vsel %vm915, %v722, %v770
        %v990 = vsel %vm915, %v435, %v868
        %v993 = vsel %vm915, %v436, %v870
        %v996 = vsel %vm915, %v437, %v872
        %v999 = vsel %vm915, %v438, %v874
        %v1002 = vsel %vm915, %v439, %v876
        %v1005 = vsel %vm915, %v440, %v878
        %v1008 = vsel %vm915, %v441, %v880
        %v1011 = vsel %vm915, %v442, %v882
        %v1044 = vunpack.c.l.b16 %v918
        %v1045 = vunpack.c.l.b16 %v942
        %v1046 = vunpack.c.l.b16 %v966
        %v1047 = vunpack.c.l.b16 %v990
        %v1048 = vunpack.c.l.b16 %v907
        %v1049 = vunpack.c.l.b16 %v921
        %v1050 = vunpack.c.l.b16 %v945
        %v1051 = vunpack.c.l.b16 %v969
        %v1052 = vunpack.c.l.b16 %v993
        %v1053 = vunpack.c.l.b16 %v908
        %v1054 = vunpack.c.l.b16 %v924
        %v1055 = vunpack.c.l.b16 %v948
        %v1056 = vunpack.c.l.b16 %v972
        %v1057 = vunpack.c.l.b16 %v996
        %v1058 = vunpack.c.l.b16 %v909
        %v1059 = vunpack.c.l.b16 %v927
        %v1060 = vunpack.c.l.b16 %v951
        %v1061 = vunpack.c.l.b16 %v975
        %v1062 = vunpack.c.l.b16 %v999
        %v1063 = vunpack.c.l.b16 %v910
        %v1064 = vunpack.c.l.b16 %v930
        %v1065 = vunpack.c.l.b16 %v954
        %v1066 = vunpack.c.l.b16 %v978
        %v1067 = vunpack.c.l.b16 %v1002
        %v1068 = vunpack.c.l.b16 %v911
        %v1069 = vunpack.c.l.b16 %v933
        %v1070 = vunpack.c.l.b16 %v957
        %v1071 = vunpack.c.l.b16 %v981
        %v1072 = vunpack.c.l.b16 %v1005
        %v1073 = vunpack.c.l.b16 %v912
        %v1074 = vunpack.c.l.b16 %v936
        %v1075 = vunpack.c.l.b16 %v960
        %v1076 = vunpack.c.l.b16 %v984
        %v1077 = vunpack.c.l.b16 %v1008
        %v1078 = vunpack.c.l.b16 %v913
        %v1079 = vunpack.c.l.b16 %v939
        %v1080 = vunpack.c.l.b16 %v963
        %v1081 = vunpack.c.l.b16 %v987
        %v1082 = vunpack.c.l.b16 %v1011
        %v1083 = vunpack.c.l.b16 %v914
        %v1084 = vld [vmem:[%s1] sm:$0xf]
        %v1085 = vld [vmem:[%s1 + $0x4] sm:$0xf]
        %v1086 = vld [vmem:[%s1 + $0x8] sm:$0xf]
        %v1087 = vld [vmem:[%s1 + $0xc] sm:$0xf]
        %v1088 = vld [vmem:[%s1 + $0x10] sm:$0xf]
        %v1089 = vld [vmem:[%s1 + $0x14] sm:$0xf]
        %v1090 = vld [vmem:[%s1 + $0x18] sm:$0xf]
        %v1091 = vld [vmem:[%s1 + $0x1c] sm:$0xf]
        %v1092 = vld [vmem:[%s1 + $0x20] sm:$0xf]
        %v1093 = vld [vmem:[%s1 + $0x24] sm:$0xf]
        %v1094 = vld [vmem:[%s1 + $0x28] sm:$0xf]
        %v1095 = vld [vmem:[%s1 + $0x2c] sm:$0xf]
        %v1096 = vld [vmem:[%s1 + $0x30] sm:$0xf]
        %v1097 = vld [vmem:[%s1 + $0x34] sm:$0xf]
        %v1098 = vld [vmem:[%s1 + $0x38] sm:$0xf]
        %v1099 = vld [vmem:[%s1 + $0x3c] sm:$0xf]
        %v1100 = vld [vmem:[%s1 + $0x40] sm:$0xf]
        %v1101 = vld [vmem:[%s1 + $0x44] sm:$0xf]
        %v1102 = vld [vmem:[%s1 + $0x48] sm:$0xf]
        %v1103 = vld [vmem:[%s1 + $0x4c] sm:$0xf]
        %v1104 = vld [vmem:[%s1 + $0x50] sm:$0xf]
        %v1105 = vld [vmem:[%s1 + $0x54] sm:$0xf]
        %v1106 = vld [vmem:[%s1 + $0x58] sm:$0xf]
        %v1107 = vld [vmem:[%s1 + $0x5c] sm:$0xf]
        %v1108 = vld [vmem:[%s1 + $0x60] sm:$0xf]
        %v1109 = vld [vmem:[%s1 + $0x64] sm:$0xf]
        %v1110 = vld [vmem:[%s1 + $0x68] sm:$0xf]
        %v1111 = vld [vmem:[%s1 + $0x6c] sm:$0xf]
        %v1112 = vld [vmem:[%s1 + $0x70] sm:$0xf]
        %v1113 = vld [vmem:[%s1 + $0x74] sm:$0xf]
        %v1114 = vld [vmem:[%s1 + $0x78] sm:$0xf]
        %v1115 = vld [vmem:[%s1 + $0x7c] sm:$0xf]
        %v1116 = vld [vmem:[%s1 + $0x80] sm:$0xf]
        %v1117 = vld [vmem:[%s1 + $0x84] sm:$0xf]
        %v1118 = vld [vmem:[%s1 + $0x88] sm:$0xf]
        %v1119 = vld [vmem:[%s1 + $0x8c] sm:$0xf]
        %v1120 = vld [vmem:[%s1 + $0x90] sm:$0xf]
        %v1121 = vld [vmem:[%s1 + $0x94] sm:$0xf]
        %v1122 = vld [vmem:[%s1 + $0x98] sm:$0xf]
        %v1123 = vld [vmem:[%s1 + $0x9c] sm:$0xf]
        %v1124 = vld [vmem:[%s1 + $0xa0] sm:$0xf]
        %v1125 = vld [vmem:[%s1 + $0xa4] sm:$0xf]
        %v1126 = vld [vmem:[%s1 + $0xa8] sm:$0xf]
        %v1127 = vld [vmem:[%s1 + $0xac] sm:$0xf]
        %v1128 = vld [vmem:[%s1 + $0xb0] sm:$0xf]
        %v1129 = vld [vmem:[%s1 + $0xb4] sm:$0xf]
        %v1130 = vld [vmem:[%s1 + $0xb8] sm:$0xf]
        %v1131 = vld [vmem:[%s1 + $0xbc] sm:$0xf]
        %v1132 = vld [vmem:[%s1 + $0xc0] sm:$0xf]
        %v1133 = vld [vmem:[%s1 + $0xc4] sm:$0xf]
        %v1134 = vld [vmem:[%s1 + $0xc8] sm:$0xf]
        %v1135 = vld [vmem:[%s1 + $0xcc] sm:$0xf]
        %v1136 = vld [vmem:[%s1 + $0xd0] sm:$0xf]
        %v1137 = vld [vmem:[%s1 + $0xd4] sm:$0xf]
        %v1138 = vld [vmem:[%s1 + $0xd8] sm:$0xf]
        %v1139 = vld [vmem:[%s1 + $0xdc] sm:$0xf]
        %v1140 = vld [vmem:[%s1 + $0xe0] sm:$0xf]
        %v1141 = vld [vmem:[%s1 + $0xe4] sm:$0xf]
        %v1142 = vld [vmem:[%s1 + $0xe8] sm:$0xf]
        %v1143 = vld [vmem:[%s1 + $0xec] sm:$0xf]
        %v1144 = vld [vmem:[%s1 + $0xf0] sm:$0xf]
        %v1145 = vld [vmem:[%s1 + $0xf4] sm:$0xf]
        %v1146 = vld [vmem:[%s1 + $0xf8] sm:$0xf]
        %v1147 = vld [vmem:[%s1 + $0xfc] sm:$0xf]
        %v1148 = vld [vmem:[%s1 + $0x100] sm:$0xf]
        %v1149 = vld [vmem:[%s1 + $0x104] sm:$0xf]
        %v1150 = vld [vmem:[%s1 + $0x108] sm:$0xf]
        %v1151 = vld [vmem:[%s1 + $0x10c] sm:$0xf]
        %v1152 = vld [vmem:[%s1 + $0x110] sm:$0xf]
        %v1153 = vld [vmem:[%s1 + $0x114] sm:$0xf]
        %v1154 = vld [vmem:[%s1 + $0x118] sm:$0xf]
        %v1155 = vld [vmem:[%s1 + $0x11c] sm:$0xf]
        %v1156 = vpack.c.b16 %v1049, %v1044
        %v1157 = vpack.c.b16 %v1050, %v1045
        %v1158 = vpack.c.b16 %v1051, %v1046
        %v1159 = vpack.c.b16 %v1052, %v1047
        %v1160 = vpack.c.b16 %v1053, %v1048
        %v1161 = vpack.c.b16 %v1059, %v1054
        %v1162 = vpack.c.b16 %v1060, %v1055
        %v1163 = vpack.c.b16 %v1061, %v1056
        %v1164 = vpack.c.b16 %v1062, %v1057
        %v1165 = vpack.c.b16 %v1063, %v1058
        %v1166 = vpack.c.b16 %v1069, %v1064
        %v1167 = vpack.c.b16 %v1070, %v1065
        %v1168 = vpack.c.b16 %v1071, %v1066
        %v1169 = vpack.c.b16 %v1072, %v1067
        %v1170 = vpack.c.b16 %v1073, %v1068
        %v1171 = vpack.c.b16 %v1079, %v1074
        %v1172 = vpack.c.b16 %v1080, %v1075
        %v1173 = vpack.c.b16 %v1081, %v1076
        %v1174 = vpack.c.b16 %v1082, %v1077
        %v1175 = vpack.c.b16 %v1083, %v1078
        %v1264 = vunpack.c.l.b16 %v1084
        %v1265 = vunpack.c.l.b16 %v1085
        %v1266 = vunpack.c.l.b16 %v1086
        %v1267 = vunpack.c.l.b16 %v1087
        %v1268 = vunpack.c.l.b16 %v1088
        %v1269 = vunpack.c.l.b16 %v1089
        %v1270 = vunpack.c.l.b16 %v1090
        %v1271 = vunpack.c.l.b16 %v1091
        %v1272 = vunpack.c.l.b16 %v1092
        %v1273 = vunpack.c.l.b16 %v1093
        %v1274 = vunpack.c.l.b16 %v1094
        %v1275 = vunpack.c.l.b16 %v1095
        %v1276 = vunpack.c.l.b16 %v1096
        %v1277 = vunpack.c.l.b16 %v1097
        %v1278 = vunpack.c.l.b16 %v1098
        %v1279 = vunpack.c.l.b16 %v1099
        %v1280 = vunpack.c.l.b16 %v1100
        %v1281 = vunpack.c.l.b16 %v1101
        %v1282 = vunpack.c.l.b16 %v1102
        %v1283 = vunpack.c.l.b16 %v1103
        %v1284 = vunpack.c.l.b16 %v1104
        %v1285 = vunpack.c.l.b16 %v1105
        %v1286 = vunpack.c.l.b16 %v1106
        %v1287 = vunpack.c.l.b16 %v1107
        %v1288 = vunpack.c.l.b16 %v1108
        %v1289 = vunpack.c.l.b16 %v1109
        %v1290 = vunpack.c.l.b16 %v1110
        %v1291 = vunpack.c.l.b16 %v1111
        %v1292 = vunpack.c.l.b16 %v1112
        %v1293 = vunpack.c.l.b16 %v1113
        %v1294 = vunpack.c.l.b16 %v1114
        %v1295 = vunpack.c.l.b16 %v1115
        %v1296 = vunpack.c.l.b16 %v1116
        %v1297 = vunpack.c.l.b16 %v1117
        %v1298 = vunpack.c.l.b16 %v1118
        %v1299 = vunpack.c.l.b16 %v1119
        %v1300 = vunpack.c.l.b16 %v1120
        %v1301 = vunpack.c.l.b16 %v1121
        %v1302 = vunpack.c.l.b16 %v1122
        %v1303 = vunpack.c.l.b16 %v1123
        %v1304 = vunpack.c.l.b16 %v1124
        %v1305 = vunpack.c.l.b16 %v1125
        %v1306 = vunpack.c.l.b16 %v1126
        %v1307 = vunpack.c.l.b16 %v1127
        %v1308 = vunpack.c.l.b16 %v1128
        %v1309 = vunpack.c.l.b16 %v1129
        %v1310 = vunpack.c.l.b16 %v1130
        %v1311 = vunpack.c.l.b16 %v1131
        %v1312 = vunpack.c.l.b16 %v1132
        %v1313 = vunpack.c.l.b16 %v1133
        %v1314 = vunpack.c.l.b16 %v1134
        %v1315 = vunpack.c.l.b16 %v1135
        %v1316 = vunpack.c.l.b16 %v1136
        %v1317 = vunpack.c.l.b16 %v1137
        %v1318 = vunpack.c.l.b16 %v1138
        %v1319 = vunpack.c.l.b16 %v1139
        %v1320 = vunpack.c.l.b16 %v1140
        %v1321 = vunpack.c.l.b16 %v1141
        %v1322 = vunpack.c.l.b16 %v1142
        %v1323 = vunpack.c.l.b16 %v1143
        %v1324 = vunpack.c.l.b16 %v1144
        %v1325 = vunpack.c.l.b16 %v1145
        %v1326 = vunpack.c.l.b16 %v1146
        %v1327 = vunpack.c.l.b16 %v1147
        %v1328 = vunpack.c.l.b16 %v1148
        %v1329 = vunpack.c.l.b16 %v1149
        %v1330 = vunpack.c.l.b16 %v1150
        %v1331 = vunpack.c.l.b16 %v1151
        %v1332 = vunpack.c.l.b16 %v1152
        %v1333 = vunpack.c.l.b16 %v1153
        %v1334 = vunpack.c.l.b16 %v1154
        %v1335 = vunpack.c.l.b16 %v1155
        %v1336 = vpack.c.b16 %v1265, %v1264
        %v1337 = vpack.c.b16 %v1267, %v1266
        %v1338 = vpack.c.b16 %v1269, %v1268
        %v1339 = vpack.c.b16 %v1271, %v1270
        %v1340 = vpack.c.b16 %v1273, %v1272
        %v1341 = vpack.c.b16 %v1275, %v1274
        %v1342 = vpack.c.b16 %v1277, %v1276
        %v1343 = vpack.c.b16 %v1279, %v1278
        %v1344 = vpack.c.b16 %v1281, %v1280
        %v1345 = vpack.c.b16 %v1283, %v1282
        %v1346 = vpack.c.b16 %v1285, %v1284
        %v1347 = vpack.c.b16 %v1287, %v1286
        %v1348 = vpack.c.b16 %v1289, %v1288
        %v1349 = vpack.c.b16 %v1291, %v1290
        %v1350 = vpack.c.b16 %v1293, %v1292
        %v1351 = vpack.c.b16 %v1295, %v1294
        %v1352 = vpack.c.b16 %v1297, %v1296
        %v1353 = vpack.c.b16 %v1299, %v1298
        %v1354 = vpack.c.b16 %v1301, %v1300
        %v1355 = vpack.c.b16 %v1303, %v1302
        %v1356 = vpack.c.b16 %v1305, %v1304
        %v1357 = vpack.c.b16 %v1307, %v1306
        %v1358 = vpack.c.b16 %v1309, %v1308
        %v1359 = vpack.c.b16 %v1311, %v1310
        %v1360 = vpack.c.b16 %v1313, %v1312
        %v1361 = vpack.c.b16 %v1315, %v1314
        %v1362 = vpack.c.b16 %v1317, %v1316
        %v1363 = vpack.c.b16 %v1319, %v1318
        %v1364 = vpack.c.b16 %v1321, %v1320
        %v1365 = vpack.c.b16 %v1323, %v1322
        %v1366 = vpack.c.b16 %v1325, %v1324
        %v1367 = vpack.c.b16 %v1327, %v1326
        %v1368 = vpack.c.b16 %v1329, %v1328
        %v1369 = vpack.c.b16 %v1331, %v1330
        %v1370 = vpack.c.b16 %v1333, %v1332
        %v1371 = vpack.c.b16 %v1335, %v1334
        %v1409 = vsel %vm915, %v1160, 0
        %v1412 = vsel %vm915, %v1165, 0
        %v1415 = vsel %vm915, %v1170, 0
        %v1418 = vsel %vm915, %v1175, 0
        %1420 = vmatprep.subr.bf16.mxu0 0
        %1421 = vmatpush1.bf16.msra.mxu0 %v1336
        %1422 = vmatprep.subr.bf16.mxu0 0
        %1423 = vmatpush1.bf16.msra.mxu0 %v1337
        %1424 = vmatprep.subr.bf16.mxu0 0
        %1425 = vmatpush1.bf16.msra.mxu0 %v1338
        %1426 = vmatprep.subr.bf16.mxu0 0
        %1427 = vmatpush1.bf16.msra.mxu0 %v1339
        %1428 = vmatprep.subr.bf16.mxu0 0
        %1429 = vmatpush1.bf16.msra.mxu0 %v1340
        %1430 = vmatprep.subr.bf16.mxu0 0
        %1431 = vmatpush1.bf16.msra.mxu0 %v1341
        %1432 = vmatprep.subr.bf16.mxu0 0
        %1433 = vmatpush1.bf16.msra.mxu0 %v1342
        %1434 = vmatprep.subr.bf16.mxu0 0
        %1435 = vmatpush1.bf16.msra.mxu0 %v1343
        %1436 = vmatprep.subr.bf16.mxu0 0
        %1437 = vmatpush1.bf16.msra.mxu0 %v1344
        %1438 = vmatprep.subr.bf16.mxu0 0
        %1439 = vmatpush1.bf16.msra.mxu0 %v1345
        %1440 = vmatprep.subr.bf16.mxu0 0
        %1441 = vmatpush1.bf16.msra.mxu0 %v1346
        %1442 = vmatprep.subr.bf16.mxu0 0
        %1443 = vmatpush1.bf16.msra.mxu0 %v1347
        %1444 = vmatprep.subr.bf16.mxu0 0
        %1445 = vmatpush1.bf16.msra.mxu0 %v1348
        %1446 = vmatprep.subr.bf16.mxu0 0
        %1447 = vmatpush1.bf16.msra.mxu0 %v1349
        %1448 = vmatprep.subr.bf16.mxu0 0
        %1449 = vmatpush1.bf16.msra.mxu0 %v1350
        %1450 = vmatprep.subr.bf16.mxu0 0
        %1451 = vmatpush1.bf16.msra.mxu0 %v1351
        %1452 = vmatprep.mubr.bf16.mxu0 %v1157
        %1453 = vmatmul.mubr.bf16.gmra.mrb[0].mxu0 %v1156
        %v1454 = vpop.f32.mrb[0].mxu0
        %v1455 = vadd.f32 0.0, %v1454
        %v1456 = vpop.f32.mrb[0].mxu0
        %v1457 = vpop.f32.mrb[0].mxu0
        %v1458 = vadd.f32 0.0, %v1457
        %v1459 = vpop.f32.mrb[0].mxu0
        %1460 = vmatprep.mubr.bf16.mxu0 %v1162
        %1461 = vmatmul.mubr.bf16.gmra.mrb[0].mxu0 %v1161
        %v1462 = vpop.f32.mrb[0].mxu0
        %v1463 = vadd.f32 0.0, %v1462
        %v1464 = vpop.f32.mrb[0].mxu0
        %v1465 = vpop.f32.mrb[0].mxu0
        %v1466 = vadd.f32 0.0, %v1465
        %v1467 = vpop.f32.mrb[0].mxu0
        %1468 = vmatprep.mubr.bf16.mxu0 %v1167
        %1469 = vmatmul.mubr.bf16.gmra.mrb[0].mxu0 %v1166
        %v1470 = vpop.f32.mrb[0].mxu0
        %v1471 = vadd.f32 0.0, %v1470
        %v1472 = vpop.f32.mrb[0].mxu0
        %v1473 = vpop.f32.mrb[0].mxu0
        %v1474 = vadd.f32 0.0, %v1473
        %v1475 = vpop.f32.mrb[0].mxu0
        %1476 = vmatprep.mubr.bf16.mxu0 %v1172
        %1477 = vmatmul.mubr.bf16.gmra.mrb[0].mxu0 %v1171
        %v1478 = vpop.f32.mrb[0].mxu0
        %v1479 = vadd.f32 0.0, %v1478
        %v1480 = vpop.f32.mrb[0].mxu0
        %v1481 = vpop.f32.mrb[0].mxu0
        %v1482 = vadd.f32 0.0, %v1481
        %v1483 = vpop.f32.mrb[0].mxu0
        %1484 = vdwg.mxu0
        %1485 = vmatprep.subr.bf16.mxu0 0
        %1486 = vmatpush1.bf16.msra.mxu0 %v1352
        %1487 = vmatprep.subr.bf16.mxu0 0
        %1488 = vmatpush1.bf16.msra.mxu0 %v1353
        %1489 = vmatprep.subr.bf16.mxu0 0
        %1490 = vmatpush1.bf16.msra.mxu0 %v1354
        %1491 = vmatprep.subr.bf16.mxu0 0
        %1492 = vmatpush1.bf16.msra.mxu0 %v1355
        %1493 = vmatprep.subr.bf16.mxu0 0
        %1494 = vmatpush1.bf16.msra.mxu0 %v1356
        %1495 = vmatprep.subr.bf16.mxu0 0
        %1496 = vmatpush1.bf16.msra.mxu0 %v1357
        %1497 = vmatprep.subr.bf16.mxu0 0
        %1498 = vmatpush1.bf16.msra.mxu0 %v1358
        %1499 = vmatprep.subr.bf16.mxu0 0
        %1500 = vmatpush1.bf16.msra.mxu0 %v1359
        %1501 = vmatprep.subr.bf16.mxu0 0
        %1502 = vmatpush1.bf16.msra.mxu0 %v1360
        %1503 = vmatprep.subr.bf16.mxu0 0
        %1504 = vmatpush1.bf16.msra.mxu0 %v1361
        %1505 = vmatprep.subr.bf16.mxu0 0
        %1506 = vmatpush1.bf16.msra.mxu0 %v1362
        %1507 = vmatprep.subr.bf16.mxu0 0
        %1508 = vmatpush1.bf16.msra.mxu0 %v1363
        %1509 = vmatprep.subr.bf16.mxu0 0
        %1510 = vmatpush1.bf16.msra.mxu0 %v1364
        %1511 = vmatprep.subr.bf16.mxu0 0
        %1512 = vmatpush1.bf16.msra.mxu0 %v1365
        %1513 = vmatprep.subr.bf16.mxu0 0
        %1514 = vmatpush1.bf16.msra.mxu0 %v1366
        %1515 = vmatprep.subr.bf16.mxu0 0
        %1516 = vmatpush1.bf16.msra.mxu0 %v1367
        %1517 = vmatprep.mubr.bf16.mxu0 %v1159
        %1518 = vmatmul.mubr.bf16.gmra.mrb[0].mxu0 %v1158
        %v1519 = vpop.f32.mrb[0].mxu0
        %v1520 = vadd.f32 %v1455, %v1519
        %v1521 = vpop.f32.mrb[0].mxu0
        %v1522 = vpop.f32.mrb[0].mxu0
        %v1523 = vadd.f32 %v1458, %v1522
        %v1524 = vpop.f32.mrb[0].mxu0
        %1525 = vmatprep.mubr.bf16.mxu0 %v1164
        %1526 = vmatmul.mubr.bf16.gmra.mrb[0].mxu0 %v1163
        %v1527 = vpop.f32.mrb[0].mxu0
        %v1528 = vadd.f32 %v1463, %v1527
        %v1529 = vpop.f32.mrb[0].mxu0
        %v1530 = vpop.f32.mrb[0].mxu0
        %v1531 = vadd.f32 %v1466, %v1530
        %v1532 = vpop.f32.mrb[0].mxu0
        %1533 = vmatprep.mubr.bf16.mxu0 %v1169
        %1534 = vmatmul.mubr.bf16.gmra.mrb[0].mxu0 %v1168
        %v1535 = vpop.f32.mrb[0].mxu0
        %v1536 = vadd.f32 %v1471, %v1535
        %v1537 = vpop.f32.mrb[0].mxu0
        %v1538 = vpop.f32.mrb[0].mxu0
        %v1539 = vadd.f32 %v1474, %v1538
        %v1540 = vpop.f32.mrb[0].mxu0
        %1541 = vmatprep.mubr.bf16.mxu0 %v1174
        %1542 = vmatmul.mubr.bf16.gmra.mrb[0].mxu0 %v1173
        %v1543 = vpop.f32.mrb[0].mxu0
        %v1544 = vadd.f32 %v1479, %v1543
        %v1545 = vpop.f32.mrb[0].mxu0
        %v1546 = vpop.f32.mrb[0].mxu0
        %v1547 = vadd.f32 %v1482, %v1546
        %v1548 = vpop.f32.mrb[0].mxu0
        %1549 = vdwg.mxu0
        %1550 = vmatprep.subr.bf16.mxu0 0
        %1551 = vmatpush1.bf16.msra.mxu0 %v1368
        %1552 = vmatprep.subr.bf16.mxu0 0
        %1553 = vmatpush1.bf16.msra.mxu0 %v1369
        %1554 = vmatprep.subr.bf16.mxu0 0
        %1555 = vmatpush1.bf16.msra.mxu0 %v1370
        %1556 = vmatprep.subr.bf16.mxu0 0
        %1557 = vmatpush1.bf16.msra.mxu0 %v1371
        %1558 = vmatprep.subr.bf16.mxu0 0
        %1559 = vmatpush1.bf16.msra.mxu0 0
        %1560 = vmatprep.subr.bf16.mxu0 0
        %1561 = vmatpush1.bf16.msra.mxu0 0
        %1562 = vmatprep.subr.bf16.mxu0 0
        %1563 = vmatpush1.bf16.msra.mxu0 0
        %1564 = vmatprep.subr.bf16.mxu0 0
        %1565 = vmatpush1.bf16.msra.mxu0 0
        %1566 = vmatprep.subr.bf16.mxu0 0
        %1567 = vmatpush1.bf16.msra.mxu0 0
        %1568 = vmatprep.subr.bf16.mxu0 0
        %1569 = vmatpush1.bf16.msra.mxu0 0
        %1570 = vmatprep.subr.bf16.mxu0 0
        %1571 = vmatpush1.bf16.msra.mxu0 0
        %1572 = vmatprep.subr.bf16.mxu0 0
        %1573 = vmatpush1.bf16.msra.mxu0 0
        %1574 = vmatprep.subr.bf16.mxu0 0
        %1575 = vmatpush1.bf16.msra.mxu0 0
        %1576 = vmatprep.subr.bf16.mxu0 0
        %1577 = vmatpush1.bf16.msra.mxu0 0
        %1578 = vmatprep.subr.bf16.mxu0 0
        %1579 = vmatpush1.bf16.msra.mxu0 0
        %1580 = vmatprep.subr.bf16.mxu0 0
        %1581 = vmatpush1.bf16.msra.mxu0 0
        %1582 = vmatprep.mubr.bf16.mxu0 0
        %1583 = vmatmul.mubr.bf16.gmra.mrb[0].mxu0 %v1409
        %v1584 = vpop.f32.mrb[0].mxu0
        %v1585 = vadd.f32 %v1520, %v1584
        %v1586 = vpop.f32.mrb[0].mxu0
        %v1587 = vpop.f32.mrb[0].mxu0
        %v1588 = vadd.f32 %v1523, %v1587
        %v1589 = vpop.f32.mrb[0].mxu0
        %1590 = vmatprep.mubr.bf16.mxu0 0
        %1591 = vmatmul.mubr.bf16.gmra.mrb[0].mxu0 %v1412
        %v1592 = vpop.f32.mrb[0].mxu0
        %v1593 = vadd.f32 %v1528, %v1592
        %v1594 = vpop.f32.mrb[0].mxu0
        %v1595 = vpop.f32.mrb[0].mxu0
        %v1596 = vadd.f32 %v1531, %v1595
        %v1597 = vpop.f32.mrb[0].mxu0
        %1598 = vmatprep.mubr.bf16.mxu0 0
        %1599 = vmatmul.mubr.bf16.gmra.mrb[0].mxu0 %v1415
        %v1600 = vpop.f32.mrb[0].mxu0
        %v1601 = vadd.f32 %v1536, %v1600
        %v1602 = vpop.f32.mrb[0].mxu0
        %v1603 = vpop.f32.mrb[0].mxu0
        %v1604 = vadd.f32 %v1539, %v1603
        %v1605 = vpop.f32.mrb[0].mxu0
        %1606 = vmatprep.mubr.bf16.mxu0 0
        %1607 = vmatmul.mubr.bf16.gmra.mrb[0].mxu0 %v1418
        %v1608 = vpop.f32.mrb[0].mxu0
        %v1609 = vadd.f32 %v1544, %v1608
        %v1610 = vpop.f32.mrb[0].mxu0
        %v1611 = vpop.f32.mrb[0].mxu0
        %v1612 = vadd.f32 %v1547, %v1611
        %v1613 = vpop.f32.mrb[0].mxu0
        %1614 = vdwg.mxu0
        %v1615 = vpack.c.bf16 %v1585, %v1585
        %v1616 = vpack.c.bf16 %v1588, %v1588
        %v1617 = vpack.c.bf16 %v1593, %v1593
        %v1618 = vpack.c.bf16 %v1596, %v1596
        %v1619 = vpack.c.bf16 %v1601, %v1601
        %v1620 = vpack.c.bf16 %v1604, %v1604
        %v1621 = vpack.c.bf16 %v1609, %v1609
        %v1622 = vpack.c.bf16 %v1612, %v1612
        %1623 = vst.msk [vmem:[%s136] sm:$0xf] %vm143, %v1615
        %1624 = vst.msk [vmem:[%s136 + $0x4] sm:$0xf] %vm143, %v1616
        %1625 = vst.msk [vmem:[%s136 + $0x8] sm:$0xf] %vm143, %v1617
        %1626 = vst.msk [vmem:[%s136 + $0xc] sm:$0xf] %vm143, %v1618
        %1627 = vst.msk [vmem:[%s136 + $0x10] sm:$0xf] %vm143, %v1619
        %1628 = vst.msk [vmem:[%s136 + $0x14] sm:$0xf] %vm143, %v1620
        %1629 = vst.msk [vmem:[%s136 + $0x18] sm:$0xf] %vm143, %v1621
        %1630 = vst.msk [vmem:[%s136 + $0x1c] sm:$0xf] %vm143, %v1622
        %s1631 = sand.u32 %s71, 1
        %s1632 = scalar_lea.sflag [#allocation4], %s1631
        %s1633 = sand.u32 %s71, 1
        %s1634 = smul.addr %s1633, 32
        %s1635 = scalar_lea.vmem [#allocation3], %s1634
        // Predicated region
        $region29: #{tpu_custom_call.1} parent=27 // pred_check
          %p1636 = pneg %p81
        $region30: #{tpu_custom_call.1} parent=27 // pred_check_branch
          %1638 = sbr.rel (%p1636) target = $region32
        $region31: #{tpu_custom_call.1} parent=27 // pred_region
          %s1640 = ssub.s32 512, 512
          %1641 = vsyncadd %s1632, %s1640
          %s1642 = smul.addr %s16, 8
          %s1643 = smul.addr %s1642, 64
          %s1644 = scalar_lea.hbm %s2, %s1643
          %s1645 = sshll.u32 %s1635, 4
          %s1646 = int_to_ptr.vmem [resolvable:$true] %s1645
          %1651 = dma.vmem_to_hbm [thread:$0]  %s1646, 512, %s1644, %s1632, 64, 64, 4
        $region32: #{tpu_custom_call.1} parent=27 // pred_fallthru
          _
      $region28: #{tpu_custom_call.1} parent=5 // pred_fallthru
        _
      %p1652 = scmp.le.s32.totalorder 2, %s11
      // Predicated region
      $region33: #{tpu_custom_call.1} parent=5 // pred_check
        %p1653 = pneg %p1652
      $region34: #{tpu_custom_call.1} parent=5 // pred_check_branch
        %1655 = sbr.rel (%p1653) target = $region36
      $region35: #{tpu_custom_call.1} parent=5 // pred_region
        %s1656 = ssub.s32 %s11, 2
        // Predicated region
        $region37: #{tpu_custom_call.1} parent=35 // pred_check
          %p1657 = pneg %p87
        $region38: #{tpu_custom_call.1} parent=35 // pred_check_branch
          %1659 = sbr.rel (%p1657) target = $region40
        $region39: #{tpu_custom_call.1} parent=35 // pred_region
          %s1660 = sand.u32 %s72, 1
          %s1661 = scalar_lea.sflag [#allocation4], %s1660
          %s1662 = sand.u32 %s72, 1
          %s1663 = smul.addr %s1662, 32
          %s1664 = scalar_lea.vmem [#allocation3], %s1663
          %1665 = dma.done %s1661, 512
        $region40: #{tpu_custom_call.1} parent=35 // pred_fallthru
          _
      $region36: #{tpu_custom_call.1} parent=5 // pred_fallthru
        _
    $region6: #{tpu_custom_call.1} parent=1 // loop_footer
      %s15 = sadd.s32 1, %s11
    $region7: #{tpu_custom_call.1} parent=1 // loop_footer_branch
      %10 = sbr.rel target = $region3
    $region8: #{tpu_custom_call.1} parent=1 // loop_exit
      _
    %1666 = vsyncpa [#allocation4], 1
    %s1667 = scalar_lea.sflag [#allocation4], 1
    %1668 = vsyncpa %s1667, 1

</llo_original>
